<compile_context>
chip_gen: v7x
topology: tpu7x:2x2x1
jax: 0.10.0
libtpu: 0.0.40
codegen_flags: <defaults>
</compile_context>

<pallas_src>
import functools

import jax
import jax.numpy as jnp
from jax import lax
from jax.experimental import pallas as pl
from jax.experimental.pallas import tpu as pltpu


LANE = 128   # lane width
BM = 8       # batch tile (sublane granule)


def _rup(n, m):
    return ((n + m - 1) // m) * m


# ----------------------------- Fused Pallas kernel -----------------------------

def _fused_kernel(
    x_ref, eps_ref,
    w1_ref, b1_ref, wm_ref, bm_ref, wv_ref, bv_ref,
    dw1_ref, db1_ref, dw2_ref, db2_ref,
    cb_ref, e2_ref,
    xhat_ref, mean_ref, logvar_ref, quant_ref, qdist_ref,
    *, inv_tau,
):
    f32 = jnp.float32
    bf16 = jnp.bfloat16

    # ---------- VAE encoder: fc1 + relu, then mean / logvar heads ----------
    x = x_ref[...]                                               # (BM, Xp) f32
    h = jnp.dot(x.astype(bf16), w1_ref[...],
                preferred_element_type=f32) + b1_ref[...]
    h = jnp.maximum(h, 0.0)                                      # (BM, Hp) f32
    hb = h.astype(bf16)

    mean = jnp.dot(hb, wm_ref[...], preferred_element_type=f32) + bm_ref[...]
    logvar = jnp.dot(hb, wv_ref[...], preferred_element_type=f32) + bv_ref[...]
    mean_ref[...] = mean
    logvar_ref[...] = logvar

    # ---------- reparameterize (f32) + decoder ----------
    z = mean + jnp.exp(0.5 * logvar) * eps_ref[...]              # (BM, Lp)
    hd = jnp.dot(z.astype(bf16), dw1_ref[...],
                 preferred_element_type=f32) + db1_ref[...]
    hd = jnp.maximum(hd, 0.0)
    xh = jnp.dot(hd.astype(bf16), dw2_ref[...],
                 preferred_element_type=f32) + db2_ref[...]
    xhat_ref[...] = jax.nn.sigmoid(xh)                           # (BM, Xp)

    # ---------- SoftVQ on mean (detach == stop_gradient, forward-identical) ----------
    # d^2 = ||m||^2 + ||e||^2 - 2 m.e ; the ||m||^2 term is constant over codes and
    # cancels after the max-subtraction + normalization, so it is dropped.
    e = cb_ref[...]                                              # (Kp, Lp) f32
    cross = lax.dot_general(mean, e, (((1,), (1,)), ((), ())),
                            preferred_element_type=f32)          # (BM, Kp)
    logits = (2.0 * cross - e2_ref[...]) * inv_tau               # padded codes -> -huge
    logits = logits - jnp.max(logits, axis=-1, keepdims=True)
    p = jnp.exp(logits)
    p = p * pl.reciprocal(jnp.sum(p, axis=-1, keepdims=True), approx=True)
    qdist_ref[...] = p                                           # (BM, Kp)
    quant_ref[...] = jnp.dot(p, e, preferred_element_type=f32)   # (BM, Lp)


# ----------------------------- Parameter prep (once, outside the hot path) -----------------------------

def init_params(key, x_dim, hidden, latent, n_codes):
    ks = jax.random.split(key, 6)
    s = 0.02
    return {
        "enc_w1": jax.random.normal(ks[0], (x_dim, hidden), jnp.float32) * s,
        "enc_b1": jnp.zeros((1, hidden), jnp.float32),
        "enc_wm": jax.random.normal(ks[1], (hidden, latent), jnp.float32) * s,
        "enc_bm": jnp.zeros((1, latent), jnp.float32),
        "enc_wv": jax.random.normal(ks[2], (hidden, latent), jnp.float32) * s,
        "enc_bv": jnp.zeros((1, latent), jnp.float32),
        "dec_w1": jax.random.normal(ks[3], (latent, hidden), jnp.float32) * s,
        "dec_b1": jnp.zeros((1, hidden), jnp.float32),
        "dec_w2": jax.random.normal(ks[4], (hidden, x_dim), jnp.float32) * s,
        "dec_b2": jnp.zeros((1, x_dim), jnp.float32),
        "codebook": jax.random.normal(ks[5], (n_codes, latent), jnp.float32),
    }


def prepare_params(params):
    """Pad to lane-dense shapes, cast matmul weights to bf16, precompute codebook norms."""
    def pad2(a, r, c):
        return jnp.pad(a, ((0, r - a.shape[0]), (0, c - a.shape[1])))

    x_dim, hidden = params["enc_w1"].shape
    latent = params["enc_wm"].shape[1]
    n_codes = params["codebook"].shape[0]
    Xp, Hp = _rup(x_dim, LANE), _rup(hidden, LANE)
    Lp, Kp = _rup(latent, LANE), _rup(n_codes, LANE)

    cb = pad2(params["codebook"], Kp, Lp)                        # f32, padded rows = 0
    e2 = jnp.sum(cb * cb, axis=-1)                               # (Kp,)
    # Padded codes get a huge squared norm -> logits ~ -inf -> probability exactly 0.
    e2 = jnp.where(jnp.arange(Kp) < n_codes, e2, 1e30).reshape(1, Kp)

    bf16 = jnp.bfloat16
    prepared = {
        "enc_w1": pad2(params["enc_w1"], Xp, Hp).astype(bf16),
        "enc_b1": pad2(params["enc_b1"], 1, Hp),
        "enc_wm": pad2(params["enc_wm"], Hp, Lp).astype(bf16),
        "enc_bm": pad2(params["enc_bm"], 1, Lp),
        "enc_wv": pad2(params["enc_wv"], Hp, Lp).astype(bf16),
        "enc_bv": pad2(params["enc_bv"], 1, Lp),
        "dec_w1": pad2(params["dec_w1"], Lp, Hp).astype(bf16),
        "dec_b1": pad2(params["dec_b1"], 1, Hp),
        "dec_w2": pad2(params["dec_w2"], Hp, Xp).astype(bf16),
        "dec_b2": pad2(params["dec_b2"], 1, Xp),
        "codebook": cb,
        "e2": e2,
    }
    dims = (x_dim, hidden, latent, n_codes)
    return prepared, dims


# ----------------------------- Forward wrapper -----------------------------

def softvq_vae_forward(pparams, x, eps, *, dims, inv_tau):
    """Returns (x_hat, mean, logvar, quantized, q_dist) matching SoftVQVAE.forward."""
    x_dim, hidden, latent, n_codes = dims
    B, C, H, W = x.shape
    assert C * H * W == x_dim

    Xp, Hp = pparams["enc_w1"].shape
    Lp = pparams["enc_wm"].shape[1]
    Kp = pparams["codebook"].shape[0]
    Bp = _rup(max(B, BM), BM)

    x_flat = x.reshape(B, x_dim).astype(jnp.float32)
    x_flat = jnp.pad(x_flat, ((0, Bp - B), (0, Xp - x_dim)))
    eps_p = jnp.pad(eps.astype(jnp.float32), ((0, Bp - B), (0, Lp - latent)))

    kernel = functools.partial(_fused_kernel, inv_tau=inv_tau)

    batched = lambda i: (i, 0)       # batch-tiled arrays
    resident = lambda i: (0, 0)      # weights / codebook stay VMEM-resident across batch tiles

    out_shapes = (
        jax.ShapeDtypeStruct((Bp, Xp), jnp.float32),   # x_hat (flat, padded)
        jax.ShapeDtypeStruct((Bp, Lp), jnp.float32),   # mean
        jax.ShapeDtypeStruct((Bp, Lp), jnp.float32),   # logvar
        jax.ShapeDtypeStruct((Bp, Lp), jnp.float32),   # quantized
        jax.ShapeDtypeStruct((Bp, Kp), jnp.float32),   # q_dist
    )
    in_specs = [
        pl.BlockSpec((BM, Xp), batched),               # x
        pl.BlockSpec((BM, Lp), batched),               # eps
        pl.BlockSpec((Xp, Hp), resident),              # enc_w1 (bf16)
        pl.BlockSpec((1, Hp), resident),               # enc_b1
        pl.BlockSpec((Hp, Lp), resident),              # enc_wm
        pl.BlockSpec((1, Lp), resident),               # enc_bm
        pl.BlockSpec((Hp, Lp), resident),              # enc_wv
        pl.BlockSpec((1, Lp), resident),               # enc_bv
        pl.BlockSpec((Lp, Hp), resident),              # dec_w1
        pl.BlockSpec((1, Hp), resident),               # dec_b1
        pl.BlockSpec((Hp, Xp), resident),              # dec_w2
        pl.BlockSpec((1, Xp), resident),               # dec_b2
        pl.BlockSpec((Kp, Lp), resident),              # codebook (f32)
        pl.BlockSpec((1, Kp), resident),               # codebook squared norms
    ]
    out_specs = (
        pl.BlockSpec((BM, Xp), batched),
        pl.BlockSpec((BM, Lp), batched),
        pl.BlockSpec((BM, Lp), batched),
        pl.BlockSpec((BM, Lp), batched),
        pl.BlockSpec((BM, Kp), batched),
    )

    x_hat_p, mean_p, logvar_p, quant_p, qdist_p = pl.pallas_call(
        kernel,
        out_shape=out_shapes,
        grid=(Bp // BM,),
        in_specs=in_specs,
        out_specs=out_specs,
        compiler_params=pltpu.CompilerParams(
            dimension_semantics=("parallel",),          # 2 TCs split batch tiles on v7x
            vmem_limit_bytes=48 * 1024 * 1024,          # within v7x's 64 MiB VMEM
        ),
    )(
        x_flat, eps_p,
        pparams["enc_w1"], pparams["enc_b1"],
        pparams["enc_wm"], pparams["enc_bm"],
        pparams["enc_wv"], pparams["enc_bv"],
        pparams["dec_w1"], pparams["dec_b1"],
        pparams["dec_w2"], pparams["dec_b2"],
        pparams["codebook"], pparams["e2"],
    )

    x_hat = x_hat_p[:B, :x_dim].reshape(B, C, H, W)
    mean = mean_p[:B, :latent]
    logvar = logvar_p[:B, :latent]
    quantized = quant_p[:B, :latent]
    q_dist = qdist_p[:B, :n_codes]
    return x_hat, mean, logvar, quantized, q_dist


# ----------------------------- Main -----------------------------

if __name__ == "__main__":
    B, C, H, W = 2, 4, 16, 16
    hidden, latent, n_codes = 32, 16, 8
    tau = 1.0
    x_dim = C * H * W

    key = jax.random.PRNGKey(0)
    k_x, k_eps, k_p = jax.random.split(key, 3)

    x = jax.random.normal(k_x, (B, C, H, W), jnp.float32)
    eps = jax.random.normal(k_eps, (B, latent), jnp.float32)   # deterministic reparam noise
    params = init_params(k_p, x_dim, hidden, latent, n_codes)
    pparams, dims = prepare_params(params)                     # one-time pad / bf16 / norms

    fwd = jax.jit(functools.partial(softvq_vae_forward, dims=dims, inv_tau=1.0 / tau))
    x_hat, mean, logvar, quantized, q_dist = fwd(pparams, x, eps)
    jax.block_until_ready((x_hat, mean, logvar, quantized, q_dist))

    # Shape / sanity checks.
    assert x_hat.shape == (B, C, H, W)
    assert mean.shape == (B, latent)
    assert logvar.shape == (B, latent)
    assert quantized.shape == (B, latent)
    assert q_dist.shape == (B, n_codes)
    for a in (x_hat, mean, logvar, quantized, q_dist):
        assert bool(jnp.all(jnp.isfinite(a)))
    # q_dist rows are a softmax over the real codebook -> sum to ~1 (approx reciprocal).
    assert bool(jnp.all(jnp.abs(jnp.sum(q_dist, axis=-1) - 1.0) < 1e-2))
    # x_hat comes out of a sigmoid.
    assert bool(jnp.all((x_hat >= 0.0) & (x_hat <= 1.0)))

    print("KERNEL_OK")
</pallas_src>

<mosaic_0001>
module attributes {stable_mosaic.version = 11 : i64} {
  func.func @_fused_kernel(%arg0: i32, %arg1: memref<8x1024xf32, #tpu.memory_space<vmem>>, %arg2: memref<8x128xf32, #tpu.memory_space<vmem>>, %arg3: memref<1024x128xbf16, #tpu.memory_space<vmem>>, %arg4: memref<1x128xf32, #tpu.memory_space<vmem>>, %arg5: memref<128x128xbf16, #tpu.memory_space<vmem>>, %arg6: memref<1x128xf32, #tpu.memory_space<vmem>>, %arg7: memref<128x128xbf16, #tpu.memory_space<vmem>>, %arg8: memref<1x128xf32, #tpu.memory_space<vmem>>, %arg9: memref<128x128xbf16, #tpu.memory_space<vmem>>, %arg10: memref<1x128xf32, #tpu.memory_space<vmem>>, %arg11: memref<128x1024xbf16, #tpu.memory_space<vmem>>, %arg12: memref<1x1024xf32, #tpu.memory_space<vmem>>, %arg13: memref<128x128xf32, #tpu.memory_space<vmem>>, %arg14: memref<1x128xf32, #tpu.memory_space<vmem>>, %arg15: memref<8x1024xf32, #tpu.memory_space<vmem>>, %arg16: memref<8x128xf32, #tpu.memory_space<vmem>>, %arg17: memref<8x128xf32, #tpu.memory_space<vmem>>, %arg18: memref<8x128xf32, #tpu.memory_space<vmem>>, %arg19: memref<8x128xf32, #tpu.memory_space<vmem>>) attributes {dimension_semantics = [#tpu.dimension_semantics<parallel>], iteration_bounds = array<i64: 1>, scalar_prefetch = 0 : i64, scratch_operands = 0 : i64, tpu.core_type = #tpu.core_type<tc>, window_params = [{transform_indices = @transform_0, window_bounds = array<i64: 8, 1024>}, {transform_indices = @transform_1, window_bounds = array<i64: 8, 128>}, {pipeline_mode = #tpu.pipeline_mode<synchronous>, transform_indices = @transform_2, window_bounds = array<i64: 1024, 128>}, {pipeline_mode = #tpu.pipeline_mode<synchronous>, transform_indices = @transform_3, window_bounds = array<i64: 1, 128>}, {pipeline_mode = #tpu.pipeline_mode<synchronous>, transform_indices = @transform_4, window_bounds = array<i64: 128, 128>}, {pipeline_mode = #tpu.pipeline_mode<synchronous>, transform_indices = @transform_5, window_bounds = array<i64: 1, 128>}, {pipeline_mode = #tpu.pipeline_mode<synchronous>, transform_indices = @transform_6, window_bounds = array<i64: 128, 128>}, {pipeline_mode = #tpu.pipeline_mode<synchronous>, transform_indices = @transform_7, window_bounds = array<i64: 1, 128>}, {pipeline_mode = #tpu.pipeline_mode<synchronous>, transform_indices = @transform_8, window_bounds = array<i64: 128, 128>}, {pipeline_mode = #tpu.pipeline_mode<synchronous>, transform_indices = @transform_9, window_bounds = array<i64: 1, 128>}, {pipeline_mode = #tpu.pipeline_mode<synchronous>, transform_indices = @transform_10, window_bounds = array<i64: 128, 1024>}, {pipeline_mode = #tpu.pipeline_mode<synchronous>, transform_indices = @transform_11, window_bounds = array<i64: 1, 1024>}, {pipeline_mode = #tpu.pipeline_mode<synchronous>, transform_indices = @transform_12, window_bounds = array<i64: 128, 128>}, {pipeline_mode = #tpu.pipeline_mode<synchronous>, transform_indices = @transform_13, window_bounds = array<i64: 1, 128>}, {transform_indices = @transform_14, window_bounds = array<i64: 8, 1024>}, {transform_indices = @transform_15, window_bounds = array<i64: 8, 128>}, {transform_indices = @transform_16, window_bounds = array<i64: 8, 128>}, {transform_indices = @transform_17, window_bounds = array<i64: 8, 128>}, {transform_indices = @transform_18, window_bounds = array<i64: 8, 128>}]} {
    %c0 = arith.constant 0 : index
    %c0_0 = arith.constant 0 : index
    %0 = vector.load %arg1[%c0, %c0_0] : memref<8x1024xf32, #tpu.memory_space<vmem>>, vector<8x1024xf32>
    %1 = arith.truncf %0 : vector<8x1024xf32> to vector<8x1024xbf16>
    %c0_1 = arith.constant 0 : index
    %c0_2 = arith.constant 0 : index
    %2 = vector.load %arg3[%c0_1, %c0_2] : memref<1024x128xbf16, #tpu.memory_space<vmem>>, vector<1024x128xbf16>
    %cst = arith.constant dense<0.000000e+00> : vector<8x128xf32>
    %3 = tpu.matmul %1, %2, %cst {dimension_numbers = #tpu.dot_dimension_numbers<[1], [0], [0], [1], [0, 0, 1, 1], [], []>} : vector<8x1024xbf16>, vector<1024x128xbf16>, vector<8x128xf32> -> vector<8x128xf32>
    %c0_3 = arith.constant 0 : index
    %c0_4 = arith.constant 0 : index
    %4 = vector.load %arg4[%c0_3, %c0_4] : memref<1x128xf32, #tpu.memory_space<vmem>>, vector<1x128xf32>
    %5 = vector.broadcast %4 : vector<1x128xf32> to vector<8x128xf32>
    %6 = arith.addf %3, %5 : vector<8x128xf32>
    %cst_5 = arith.constant 0.000000e+00 : f32
    %7 = vector.broadcast %cst_5 : f32 to vector<8x128xf32>
    %8 = arith.maximumf %6, %7 : vector<8x128xf32>
    %9 = arith.truncf %8 : vector<8x128xf32> to vector<8x128xbf16>
    %c0_6 = arith.constant 0 : index
    %c0_7 = arith.constant 0 : index
    %10 = vector.load %arg5[%c0_6, %c0_7] : memref<128x128xbf16, #tpu.memory_space<vmem>>, vector<128x128xbf16>
    %cst_8 = arith.constant dense<0.000000e+00> : vector<8x128xf32>
    %11 = tpu.matmul %9, %10, %cst_8 {dimension_numbers = #tpu.dot_dimension_numbers<[1], [0], [0], [1], [0, 0, 1, 1], [], []>} : vector<8x128xbf16>, vector<128x128xbf16>, vector<8x128xf32> -> vector<8x128xf32>
    %c0_9 = arith.constant 0 : index
    %c0_10 = arith.constant 0 : index
    %12 = vector.load %arg6[%c0_9, %c0_10] : memref<1x128xf32, #tpu.memory_space<vmem>>, vector<1x128xf32>
    %13 = vector.broadcast %12 : vector<1x128xf32> to vector<8x128xf32>
    %14 = arith.addf %11, %13 : vector<8x128xf32>
    %c0_11 = arith.constant 0 : index
    %c0_12 = arith.constant 0 : index
    %15 = vector.load %arg7[%c0_11, %c0_12] : memref<128x128xbf16, #tpu.memory_space<vmem>>, vector<128x128xbf16>
    %cst_13 = arith.constant dense<0.000000e+00> : vector<8x128xf32>
    %16 = tpu.matmul %9, %15, %cst_13 {dimension_numbers = #tpu.dot_dimension_numbers<[1], [0], [0], [1], [0, 0, 1, 1], [], []>} : vector<8x128xbf16>, vector<128x128xbf16>, vector<8x128xf32> -> vector<8x128xf32>
    %c0_14 = arith.constant 0 : index
    %c0_15 = arith.constant 0 : index
    %17 = vector.load %arg8[%c0_14, %c0_15] : memref<1x128xf32, #tpu.memory_space<vmem>>, vector<1x128xf32>
    %18 = vector.broadcast %17 : vector<1x128xf32> to vector<8x128xf32>
    %19 = arith.addf %16, %18 : vector<8x128xf32>
    %c0_16 = arith.constant 0 : index
    %c0_17 = arith.constant 0 : index
    %20 = vector.load %arg16[%c0_16, %c0_17] : memref<8x128xf32, #tpu.memory_space<vmem>>, vector<8x128xf32>
    tpu.vector_store %arg16[%c0_16, %c0_17], %14 {strides = array<i32>} : memref<8x128xf32, #tpu.memory_space<vmem>>, vector<8x128xf32>,
    %c0_18 = arith.constant 0 : index
    %c0_19 = arith.constant 0 : index
    %21 = vector.load %arg17[%c0_18, %c0_19] : memref<8x128xf32, #tpu.memory_space<vmem>>, vector<8x128xf32>
    tpu.vector_store %arg17[%c0_18, %c0_19], %19 {strides = array<i32>} : memref<8x128xf32, #tpu.memory_space<vmem>>, vector<8x128xf32>,
    %cst_20 = arith.constant 5.000000e-01 : f32
    %22 = vector.broadcast %cst_20 : f32 to vector<8x128xf32>
    %23 = arith.mulf %22, %19 : vector<8x128xf32>
    %24 = math.exp %23 : vector<8x128xf32>
    %c0_21 = arith.constant 0 : index
    %c0_22 = arith.constant 0 : index
    %25 = vector.load %arg2[%c0_21, %c0_22] : memref<8x128xf32, #tpu.memory_space<vmem>>, vector<8x128xf32>
    %26 = arith.mulf %24, %25 : vector<8x128xf32>
    %27 = arith.addf %14, %26 : vector<8x128xf32>
    %28 = arith.truncf %27 : vector<8x128xf32> to vector<8x128xbf16>
    %c0_23 = arith.constant 0 : index
    %c0_24 = arith.constant 0 : index
    %29 = vector.load %arg9[%c0_23, %c0_24] : memref<128x128xbf16, #tpu.memory_space<vmem>>, vector<128x128xbf16>
    %cst_25 = arith.constant dense<0.000000e+00> : vector<8x128xf32>
    %30 = tpu.matmul %28, %29, %cst_25 {dimension_numbers = #tpu.dot_dimension_numbers<[1], [0], [0], [1], [0, 0, 1, 1], [], []>} : vector<8x128xbf16>, vector<128x128xbf16>, vector<8x128xf32> -> vector<8x128xf32>
    %c0_26 = arith.constant 0 : index
    %c0_27 = arith.constant 0 : index
    %31 = vector.load %arg10[%c0_26, %c0_27] : memref<1x128xf32, #tpu.memory_space<vmem>>, vector<1x128xf32>
    %32 = vector.broadcast %31 : vector<1x128xf32> to vector<8x128xf32>
    %33 = arith.addf %30, %32 : vector<8x128xf32>
    %cst_28 = arith.constant 0.000000e+00 : f32
    %34 = vector.broadcast %cst_28 : f32 to vector<8x128xf32>
    %35 = arith.maximumf %33, %34 : vector<8x128xf32>
    %36 = arith.truncf %35 : vector<8x128xf32> to vector<8x128xbf16>
    %c0_29 = arith.constant 0 : index
    %c0_30 = arith.constant 0 : index
    %37 = vector.load %arg11[%c0_29, %c0_30] : memref<128x1024xbf16, #tpu.memory_space<vmem>>, vector<128x1024xbf16>
    %cst_31 = arith.constant dense<0.000000e+00> : vector<8x1024xf32>
    %38 = tpu.matmul %36, %37, %cst_31 {dimension_numbers = #tpu.dot_dimension_numbers<[1], [0], [0], [1], [0, 0, 1, 1], [], []>} : vector<8x128xbf16>, vector<128x1024xbf16>, vector<8x1024xf32> -> vector<8x1024xf32>
    %c0_32 = arith.constant 0 : index
    %c0_33 = arith.constant 0 : index
    %39 = vector.load %arg12[%c0_32, %c0_33] : memref<1x1024xf32, #tpu.memory_space<vmem>>, vector<1x1024xf32>
    %40 = vector.broadcast %39 : vector<1x1024xf32> to vector<8x1024xf32>
    %41 = arith.addf %38, %40 : vector<8x1024xf32>
    %42 = arith.negf %41 : vector<8x1024xf32>
    %43 = math.exp %42 : vector<8x1024xf32>
    %cst_34 = arith.constant 1.000000e+00 : f32
    %44 = vector.broadcast %cst_34 : f32 to vector<8x1024xf32>
    %45 = arith.addf %44, %43 : vector<8x1024xf32>
    %46 = arith.divf %44, %45 : vector<8x1024xf32>
    %c0_35 = arith.constant 0 : index
    %c0_36 = arith.constant 0 : index
    %47 = vector.load %arg15[%c0_35, %c0_36] : memref<8x1024xf32, #tpu.memory_space<vmem>>, vector<8x1024xf32>
    tpu.vector_store %arg15[%c0_35, %c0_36], %46 {strides = array<i32>} : memref<8x1024xf32, #tpu.memory_space<vmem>>, vector<8x1024xf32>,
    %c0_37 = arith.constant 0 : index
    %c0_38 = arith.constant 0 : index
    %48 = vector.load %arg13[%c0_37, %c0_38] : memref<128x128xf32, #tpu.memory_space<vmem>>, vector<128x128xf32>
    %cst_39 = arith.constant dense<0.000000e+00> : vector<8x128xf32>
    %49 = tpu.matmul %14, %48, %cst_39 {dimension_numbers = #tpu.dot_dimension_numbers<[1], [1], [0], [0], [0, 0, 1, 0], [], []>} : vector<8x128xf32>, vector<128x128xf32>, vector<8x128xf32> -> vector<8x128xf32>
    %cst_40 = arith.constant 2.000000e+00 : f32
    %50 = vector.broadcast %cst_40 : f32 to vector<8x128xf32>
    %51 = arith.mulf %50, %49 : vector<8x128xf32>
    %c0_41 = arith.constant 0 : index
    %c0_42 = arith.constant 0 : index
    %52 = vector.load %arg14[%c0_41, %c0_42] : memref<1x128xf32, #tpu.memory_space<vmem>>, vector<1x128xf32>
    %53 = vector.broadcast %52 : vector<1x128xf32> to vector<8x128xf32>
    %54 = arith.subf %51, %53 : vector<8x128xf32>
    %cst_43 = arith.constant 1.000000e+00 : f32
    %55 = vector.broadcast %cst_43 : f32 to vector<8x128xf32>
    %56 = arith.mulf %54, %55 : vector<8x128xf32>
    %cst_44 = arith.constant dense<0xFF800000> : vector<8xf32>
    %57 = vector.multi_reduction <maximumf>, %56, %cst_44 [1] : vector<8x128xf32> to vector<8xf32>
    %58 = vector.shape_cast %57 : vector<8xf32> to vector<8x1xf32>
    %59 = vector.broadcast %58 : vector<8x1xf32> to vector<8x128xf32>
    %60 = arith.subf %56, %59 : vector<8x128xf32>
    %61 = math.exp %60 : vector<8x128xf32>
    %cst_45 = arith.constant dense<0.000000e+00> : vector<8xf32>
    %62 = vector.multi_reduction <add>, %61, %cst_45 [1] : vector<8x128xf32> to vector<8xf32>
    %63 = vector.shape_cast %62 : vector<8xf32> to vector<8x1xf32>
    %64 = tpu.reciprocal %63 {approx = true} : vector<8x1xf32> -> vector<8x1xf32>
    %65 = vector.broadcast %64 : vector<8x1xf32> to vector<8x128xf32>
    %66 = arith.mulf %61, %65 : vector<8x128xf32>
    %c0_46 = arith.constant 0 : index
    %c0_47 = arith.constant 0 : index
    %67 = vector.load %arg19[%c0_46, %c0_47] : memref<8x128xf32, #tpu.memory_space<vmem>>, vector<8x128xf32>
    tpu.vector_store %arg19[%c0_46, %c0_47], %66 {strides = array<i32>} : memref<8x128xf32, #tpu.memory_space<vmem>>, vector<8x128xf32>,
    %cst_48 = arith.constant dense<0.000000e+00> : vector<8x128xf32>
    %68 = tpu.matmul %66, %48, %cst_48 {dimension_numbers = #tpu.dot_dimension_numbers<[1], [0], [0], [1], [0, 0, 1, 1], [], []>} : vector<8x128xf32>, vector<128x128xf32>, vector<8x128xf32> -> vector<8x128xf32>
    %c0_49 = arith.constant 0 : index
    %c0_50 = arith.constant 0 : index
    %69 = vector.load %arg18[%c0_49, %c0_50] : memref<8x128xf32, #tpu.memory_space<vmem>>, vector<8x128xf32>
    tpu.vector_store %arg18[%c0_49, %c0_50], %68 {strides = array<i32>} : memref<8x128xf32, #tpu.memory_space<vmem>>, vector<8x128xf32>,
    return
  }
  func.func @transform_0(%arg0: i32) -> (i32, i32) {
    %c0_i32 = arith.constant 0 : i32
    %c0_i32_0 = arith.constant 0 : i32
    return %arg0, %c0_i32 : i32, i32
  }
  func.func @transform_1(%arg0: i32) -> (i32, i32) {
    %c0_i32 = arith.constant 0 : i32
    %c0_i32_0 = arith.constant 0 : i32
    return %arg0, %c0_i32 : i32, i32
  }
  func.func @transform_2(%arg0: i32) -> (i32, i32) {
    %c0_i32 = arith.constant 0 : i32
    %c0_i32_0 = arith.constant 0 : i32
    %c0_i32_1 = arith.constant 0 : i32
    return %c0_i32, %c0_i32_0 : i32, i32
  }
  func.func @transform_3(%arg0: i32) -> (i32, i32) {
    %c0_i32 = arith.constant 0 : i32
    %c0_i32_0 = arith.constant 0 : i32
    %c0_i32_1 = arith.constant 0 : i32
    return %c0_i32, %c0_i32_0 : i32, i32
  }
  func.func @transform_4(%arg0: i32) -> (i32, i32) {
    %c0_i32 = arith.constant 0 : i32
    %c0_i32_0 = arith.constant 0 : i32
    %c0_i32_1 = arith.constant 0 : i32
    return %c0_i32, %c0_i32_0 : i32, i32
  }
  func.func @transform_5(%arg0: i32) -> (i32, i32) {
    %c0_i32 = arith.constant 0 : i32
    %c0_i32_0 = arith.constant 0 : i32
    %c0_i32_1 = arith.constant 0 : i32
    return %c0_i32, %c0_i32_0 : i32, i32
  }
  func.func @transform_6(%arg0: i32) -> (i32, i32) {
    %c0_i32 = arith.constant 0 : i32
    %c0_i32_0 = arith.constant 0 : i32
    %c0_i32_1 = arith.constant 0 : i32
    return %c0_i32, %c0_i32_0 : i32, i32
  }
  func.func @transform_7(%arg0: i32) -> (i32, i32) {
    %c0_i32 = arith.constant 0 : i32
    %c0_i32_0 = arith.constant 0 : i32
    %c0_i32_1 = arith.constant 0 : i32
    return %c0_i32, %c0_i32_0 : i32, i32
  }
  func.func @transform_8(%arg0: i32) -> (i32, i32) {
    %c0_i32 = arith.constant 0 : i32
    %c0_i32_0 = arith.constant 0 : i32
    %c0_i32_1 = arith.constant 0 : i32
    return %c0_i32, %c0_i32_0 : i32, i32
  }
  func.func @transform_9(%arg0: i32) -> (i32, i32) {
    %c0_i32 = arith.constant 0 : i32
    %c0_i32_0 = arith.constant 0 : i32
    %c0_i32_1 = arith.constant 0 : i32
    return %c0_i32, %c0_i32_0 : i32, i32
  }
  func.func @transform_10(%arg0: i32) -> (i32, i32) {
    %c0_i32 = arith.constant 0 : i32
    %c0_i32_0 = arith.constant 0 : i32
    %c0_i32_1 = arith.constant 0 : i32
    return %c0_i32, %c0_i32_0 : i32, i32
  }
  func.func @transform_11(%arg0: i32) -> (i32, i32) {
    %c0_i32 = arith.constant 0 : i32
    %c0_i32_0 = arith.constant 0 : i32
    %c0_i32_1 = arith.constant 0 : i32
    return %c0_i32, %c0_i32_0 : i32, i32
  }
  func.func @transform_12(%arg0: i32) -> (i32, i32) {
    %c0_i32 = arith.constant 0 : i32
    %c0_i32_0 = arith.constant 0 : i32
    %c0_i32_1 = arith.constant 0 : i32
    return %c0_i32, %c0_i32_0 : i32, i32
  }
  func.func @transform_13(%arg0: i32) -> (i32, i32) {
    %c0_i32 = arith.constant 0 : i32
    %c0_i32_0 = arith.constant 0 : i32
    %c0_i32_1 = arith.constant 0 : i32
    return %c0_i32, %c0_i32_0 : i32, i32
  }
  func.func @transform_14(%arg0: i32) -> (i32, i32) {
    %c0_i32 = arith.constant 0 : i32
    %c0_i32_0 = arith.constant 0 : i32
    return %arg0, %c0_i32 : i32, i32
  }
  func.func @transform_15(%arg0: i32) -> (i32, i32) {
    %c0_i32 = arith.constant 0 : i32
    %c0_i32_0 = arith.constant 0 : i32
    return %arg0, %c0_i32 : i32, i32
  }
  func.func @transform_16(%arg0: i32) -> (i32, i32) {
    %c0_i32 = arith.constant 0 : i32
    %c0_i32_0 = arith.constant 0 : i32
    return %arg0, %c0_i32 : i32, i32
  }
  func.func @transform_17(%arg0: i32) -> (i32, i32) {
    %c0_i32 = arith.constant 0 : i32
    %c0_i32_0 = arith.constant 0 : i32
    return %arg0, %c0_i32 : i32, i32
  }
  func.func @transform_18(%arg0: i32) -> (i32, i32) {
    %c0_i32 = arith.constant 0 : i32
    %c0_i32_0 = arith.constant 0 : i32
    return %arg0, %c0_i32 : i32, i32
  }
}

</mosaic_0001>

<llo_original>
// kernel: softvq_vae_forward.1
$region0: #{softvq_vae_forward.1}
  #allocation0 [shape = 'u32[]', space=smem, size = 0x4, offset = 0x4, fixed_abs, tag = 'smem constant byte address 0x4 - core index']
  #allocation1 [shape = 'u32[144,128]{1,0:T(1,128)}', space=vmem, size = 0x12000, scoped, tag = 'internal scratch']
  %s0 = inlined_call_operand.vmem [shape: f32[8,1024], index: 0, kind: input, shape index: {}]
  %s1 = inlined_call_operand.vmem [shape: f32[8,128], index: 1, kind: input, shape index: {}]
  %s2 = inlined_call_operand.hbm [shape: bf16[1024,128], index: 2, kind: input, shape index: {}]
  %s3 = inlined_call_operand.vmem [shape: f32[1,128], index: 3, kind: input, shape index: {}]
  %s4 = inlined_call_operand.vmem [shape: bf16[128,128], index: 4, kind: input, shape index: {}]
  %s5 = inlined_call_operand.vmem [shape: f32[1,128], index: 5, kind: input, shape index: {}]
  %s6 = inlined_call_operand.vmem [shape: bf16[128,128], index: 6, kind: input, shape index: {}]
  %s7 = inlined_call_operand.vmem [shape: f32[1,128], index: 7, kind: input, shape index: {}]
  %s8 = inlined_call_operand.hbm [shape: bf16[128,128], index: 8, kind: input, shape index: {}]
  %s9 = inlined_call_operand.hbm [shape: f32[1,128], index: 9, kind: input, shape index: {}]
  %s10 = inlined_call_operand.hbm [shape: bf16[128,1024], index: 10, kind: input, shape index: {}]
  %s11 = inlined_call_operand.hbm [shape: f32[1,1024], index: 11, kind: input, shape index: {}]
  %s12 = inlined_call_operand.vmem [shape: f32[128,128], index: 12, kind: input, shape index: {}]
  %s13 = inlined_call_operand.hbm [shape: f32[1,128], index: 13, kind: input, shape index: {}]
  %s14 = inlined_call_operand.vmem [shape: f32[8,1024], index: 14, kind: output, shape index: {0}]
  %s15 = inlined_call_operand.vmem [shape: f32[8,128], index: 15, kind: output, shape index: {1}]
  %s16 = inlined_call_operand.vmem [shape: f32[8,128], index: 16, kind: output, shape index: {2}]
  %s17 = inlined_call_operand.vmem [shape: f32[8,128], index: 17, kind: output, shape index: {3}]
  %s18 = inlined_call_operand.vmem [shape: f32[8,128], index: 18, kind: output, shape index: {4}]
  %19 = xla_tuple %s14, %s15, %s16, %s17, %s18
  %s20 = sld [smem:[#allocation0]]
  $region122: #{softvq_vae_forward.1} parent=0
    _
  %s22 = ssub.s32 1, %s20
  %s23 = scalar_select 0, %s22, %s20
  $region1: #{softvq_vae_forward.1} parent=0
    #allocation2 [shape = 'u8[262144]{0}', space=vmem, size = 0x40000, scoped, tag = 'input window, operand 2, single buffered']
    #allocation3 [shape = 's32[1]{0}', space=sflag, size = 0x4, scoped, tag = 'scoped memory for softvq_vae_forward.1']
    #allocation4 [shape = 'u8[32768]{0}', space=vmem, size = 0x8000, scoped, tag = 'input window, operand 8, single buffered']
    #allocation5 [shape = 's32[1]{0}', space=sflag, size = 0x4, scoped, tag = 'scoped memory for softvq_vae_forward.1']
    #allocation6 [shape = 'u8[512]{0}', space=vmem, size = 0x400, scoped, tag = 'input window, operand 9, single buffered']
    #allocation7 [shape = 'u8[262144]{0}', space=vmem, size = 0x40000, scoped, tag = 'input window, operand 10, single buffered']
    #allocation8 [shape = 's32[1]{0}', space=sflag, size = 0x4, scoped, tag = 'scoped memory for softvq_vae_forward.1']
    #allocation9 [shape = 'u8[4096]{0}', space=vmem, size = 0x1000, scoped, tag = 'input window, operand 11, single buffered']
    #allocation10 [shape = 'u8[512]{0}', space=vmem, size = 0x400, scoped, tag = 'input window, operand 13, single buffered']
    #allocation11 [shape = 's32[1]{0}', space=sflag, size = 0x4, scoped, tag = 'scoped memory for softvq_vae_forward.1']
    %24 = vsyncpa [#allocation3], 0
    %25 = vsyncpa [#allocation5], 0
    %26 = vsyncpa [#allocation8], 0
    %27 = vsyncpa [#allocation11], 0
    // Predicated region
    $region2: #{softvq_vae_forward.1} parent=1 // pred_check
      _
    $region3: #{softvq_vae_forward.1} parent=1 // pred_check_branch
      %29 = sbr.rel (0) target = $region5
    $region4: #{softvq_vae_forward.1} parent=1 // pred_region
      _
    $region5: #{softvq_vae_forward.1} parent=1 // pred_fallthru
      _
    // Predicated region
    $region6: #{softvq_vae_forward.1} parent=1 // pred_check
      _
    $region7: #{softvq_vae_forward.1} parent=1 // pred_check_branch
      %31 = sbr.rel (0) target = $region9
    $region8: #{softvq_vae_forward.1} parent=1 // pred_region
      _
    $region9: #{softvq_vae_forward.1} parent=1 // pred_fallthru
      _
    // Predicated region
    $region10: #{softvq_vae_forward.1} parent=1 // pred_check
      _
    $region11: #{softvq_vae_forward.1} parent=1 // pred_check_branch
      %33 = sbr.rel (0) target = $region13
    $region12: #{softvq_vae_forward.1} parent=1 // pred_region
      %s35 = ssub.s32 8192, 8192
      %36 = vsyncadd [#allocation3], %s35
      %s37 = sshll.u32 [#allocation2], 4
      %s38 = int_to_ptr.vmem [resolvable:$true] %s37
      %43 = dma.hbm_to_vmem [thread:$0]  %s2, 8192, %s38, [#allocation3], 64, 64, 4
    $region13: #{softvq_vae_forward.1} parent=1 // pred_fallthru
      _
    // Predicated region
    $region14: #{softvq_vae_forward.1} parent=1 // pred_check
      _
    $region15: #{softvq_vae_forward.1} parent=1 // pred_check_branch
      %45 = sbr.rel (0) target = $region17
    $region16: #{softvq_vae_forward.1} parent=1 // pred_region
      _
    $region17: #{softvq_vae_forward.1} parent=1 // pred_fallthru
      _
    // Predicated region
    $region18: #{softvq_vae_forward.1} parent=1 // pred_check
      _
    $region19: #{softvq_vae_forward.1} parent=1 // pred_check_branch
      %47 = sbr.rel (0) target = $region21
    $region20: #{softvq_vae_forward.1} parent=1 // pred_region
      _
    $region21: #{softvq_vae_forward.1} parent=1 // pred_fallthru
      _
    // Predicated region
    $region22: #{softvq_vae_forward.1} parent=1 // pred_check
      _
    $region23: #{softvq_vae_forward.1} parent=1 // pred_check_branch
      %49 = sbr.rel (0) target = $region25
    $region24: #{softvq_vae_forward.1} parent=1 // pred_region
      _
    $region25: #{softvq_vae_forward.1} parent=1 // pred_fallthru
      _
    // Predicated region
    $region26: #{softvq_vae_forward.1} parent=1 // pred_check
      _
    $region27: #{softvq_vae_forward.1} parent=1 // pred_check_branch
      %51 = sbr.rel (0) target = $region29
    $region28: #{softvq_vae_forward.1} parent=1 // pred_region
      _
    $region29: #{softvq_vae_forward.1} parent=1 // pred_fallthru
      _
    // Predicated region
    $region30: #{softvq_vae_forward.1} parent=1 // pred_check
      _
    $region31: #{softvq_vae_forward.1} parent=1 // pred_check_branch
      %53 = sbr.rel (0) target = $region33
    $region32: #{softvq_vae_forward.1} parent=1 // pred_region
      _
    $region33: #{softvq_vae_forward.1} parent=1 // pred_fallthru
      _
    // Predicated region
    $region34: #{softvq_vae_forward.1} parent=1 // pred_check
      _
    $region35: #{softvq_vae_forward.1} parent=1 // pred_check_branch
      %55 = sbr.rel (0) target = $region37
    $region36: #{softvq_vae_forward.1} parent=1 // pred_region
      %s57 = ssub.s32 1024, 1024
      %58 = vsyncadd [#allocation5], %s57
      %s59 = sshll.u32 [#allocation4], 4
      %s60 = int_to_ptr.vmem [resolvable:$true] %s59
      %65 = dma.hbm_to_vmem [thread:$0]  %s8, 1024, %s60, [#allocation5], 64, 64, 4
    $region37: #{softvq_vae_forward.1} parent=1 // pred_fallthru
      _
    // Predicated region
    $region38: #{softvq_vae_forward.1} parent=1 // pred_check
      _
    $region39: #{softvq_vae_forward.1} parent=1 // pred_check_branch
      %67 = sbr.rel (0) target = $region41
    $region40: #{softvq_vae_forward.1} parent=1 // pred_region
      %s69 = ssub.s32 16, 16
      %70 = vsyncadd [#allocation5], %s69
      %s72 = sshll.u32 [#allocation6], 4
      %s73 = int_to_ptr.vmem [resolvable:$true] %s72
      %75 = dma.hbm_to_vmem [thread:$0]  %s9, 16, %s73, [#allocation5]
    $region41: #{softvq_vae_forward.1} parent=1 // pred_fallthru
      _
    // Predicated region
    $region42: #{softvq_vae_forward.1} parent=1 // pred_check
      _
    $region43: #{softvq_vae_forward.1} parent=1 // pred_check_branch
      %77 = sbr.rel (0) target = $region45
    $region44: #{softvq_vae_forward.1} parent=1 // pred_region
      %s79 = ssub.s32 8192, 8192
      %80 = vsyncadd [#allocation8], %s79
      %s81 = sshll.u32 [#allocation7], 4
      %s82 = int_to_ptr.vmem [resolvable:$true] %s81
      %87 = dma.hbm_to_vmem [thread:$0]  %s10, 8192, %s82, [#allocation8], 512, 512, 32
    $region45: #{softvq_vae_forward.1} parent=1 // pred_fallthru
      _
    // Predicated region
    $region46: #{softvq_vae_forward.1} parent=1 // pred_check
      _
    $region47: #{softvq_vae_forward.1} parent=1 // pred_check_branch
      %89 = sbr.rel (0) target = $region49
    $region48: #{softvq_vae_forward.1} parent=1 // pred_region
      %s91 = ssub.s32 128, 128
      %92 = vsyncadd [#allocation8], %s91
      %s94 = sshll.u32 [#allocation9], 4
      %s95 = int_to_ptr.vmem [resolvable:$true] %s94
      %97 = dma.hbm_to_vmem [thread:$0]  %s11, 128, %s95, [#allocation8]
    $region49: #{softvq_vae_forward.1} parent=1 // pred_fallthru
      _
    // Predicated region
    $region50: #{softvq_vae_forward.1} parent=1 // pred_check
      _
    $region51: #{softvq_vae_forward.1} parent=1 // pred_check_branch
      %99 = sbr.rel (0) target = $region53
    $region52: #{softvq_vae_forward.1} parent=1 // pred_region
      _
    $region53: #{softvq_vae_forward.1} parent=1 // pred_fallthru
      _
    // Predicated region
    $region54: #{softvq_vae_forward.1} parent=1 // pred_check
      _
    $region55: #{softvq_vae_forward.1} parent=1 // pred_check_branch
      %101 = sbr.rel (0) target = $region57
    $region56: #{softvq_vae_forward.1} parent=1 // pred_region
      %s103 = ssub.s32 16, 16
      %104 = vsyncadd [#allocation11], %s103
      %s106 = sshll.u32 [#allocation10], 4
      %s107 = int_to_ptr.vmem [resolvable:$true] %s106
      %109 = dma.hbm_to_vmem [thread:$0]  %s13, 16, %s107, [#allocation11]
    $region57: #{softvq_vae_forward.1} parent=1 // pred_fallthru
      _
    // Predicated region
    $region58: #{softvq_vae_forward.1} parent=1 // pred_check
      _
    $region59: #{softvq_vae_forward.1} parent=1 // pred_check_branch
      %111 = sbr.rel (0) target = $region61
    $region60: #{softvq_vae_forward.1} parent=1 // pred_region
      %112 = dma.done [#allocation3], 8192
    $region61: #{softvq_vae_forward.1} parent=1 // pred_fallthru
      _
    // Predicated region
    $region62: #{softvq_vae_forward.1} parent=1 // pred_check
      _
    $region63: #{softvq_vae_forward.1} parent=1 // pred_check_branch
      %114 = sbr.rel (0) target = $region65
    $region64: #{softvq_vae_forward.1} parent=1 // pred_region
      %115 = dma.done [#allocation5], 1024
    $region65: #{softvq_vae_forward.1} parent=1 // pred_fallthru
      _
    // Predicated region
    $region66: #{softvq_vae_forward.1} parent=1 // pred_check
      _
    $region67: #{softvq_vae_forward.1} parent=1 // pred_check_branch
      %117 = sbr.rel (0) target = $region69
    $region68: #{softvq_vae_forward.1} parent=1 // pred_region
      %118 = dma.done [#allocation5], 16
    $region69: #{softvq_vae_forward.1} parent=1 // pred_fallthru
      _
    // Predicated region
    $region70: #{softvq_vae_forward.1} parent=1 // pred_check
      _
    $region71: #{softvq_vae_forward.1} parent=1 // pred_check_branch
      %120 = sbr.rel (0) target = $region73
    $region72: #{softvq_vae_forward.1} parent=1 // pred_region
      %121 = dma.done [#allocation8], 8192
    $region73: #{softvq_vae_forward.1} parent=1 // pred_fallthru
      _
    // Predicated region
    $region74: #{softvq_vae_forward.1} parent=1 // pred_check
      _
    $region75: #{softvq_vae_forward.1} parent=1 // pred_check_branch
      %123 = sbr.rel (0) target = $region77
    $region76: #{softvq_vae_forward.1} parent=1 // pred_region
      %124 = dma.done [#allocation8], 128
    $region77: #{softvq_vae_forward.1} parent=1 // pred_fallthru
      _
    // Predicated region
    $region78: #{softvq_vae_forward.1} parent=1 // pred_check
      _
    $region79: #{softvq_vae_forward.1} parent=1 // pred_check_branch
      %126 = sbr.rel (0) target = $region81
    $region80: #{softvq_vae_forward.1} parent=1 // pred_region
      %127 = dma.done [#allocation11], 16
    $region81: #{softvq_vae_forward.1} parent=1 // pred_fallthru
      _
    %v129 = vld [vmem:[%s0] sm:$0xff]
    %v130 = vld [vmem:[%s0 + $0x8] sm:$0xff]
    %v131 = vld [vmem:[%s0 + $0x10] sm:$0xff]
    %v132 = vld [vmem:[%s0 + $0x18] sm:$0xff]
    %v133 = vld [vmem:[%s0 + $0x20] sm:$0xff]
    %v134 = vld [vmem:[%s0 + $0x28] sm:$0xff]
    %v135 = vld [vmem:[%s0 + $0x30] sm:$0xff]
    %v136 = vld [vmem:[%s0 + $0x38] sm:$0xff]
    %v137 = vpack.c.bf16 %v129, %v129
    %v138 = vpack.c.bf16 %v130, %v130
    %v139 = vpack.c.bf16 %v131, %v131
    %v140 = vpack.c.bf16 %v132, %v132
    %v141 = vpack.c.bf16 %v133, %v133
    %v142 = vpack.c.bf16 %v134, %v134
    %v143 = vpack.c.bf16 %v135, %v135
    %v144 = vpack.c.bf16 %v136, %v136
    %v145 = vld [vmem:[#allocation2] sm:$0xf]
    %v146 = vld [vmem:[#allocation2 + $0x4] sm:$0xf]
    %v147 = vld [vmem:[#allocation2 + $0x8] sm:$0xf]
    %v148 = vld [vmem:[#allocation2 + $0xc] sm:$0xf]
    %v149 = vld [vmem:[#allocation2 + $0x10] sm:$0xf]
    %v150 = vld [vmem:[#allocation2 + $0x14] sm:$0xf]
    %v151 = vld [vmem:[#allocation2 + $0x18] sm:$0xf]
    %v152 = vld [vmem:[#allocation2 + $0x1c] sm:$0xf]
    %v153 = vld [vmem:[#allocation2 + $0x20] sm:$0xf]
    %v154 = vld [vmem:[#allocation2 + $0x24] sm:$0xf]
    %v155 = vld [vmem:[#allocation2 + $0x28] sm:$0xf]
    %v156 = vld [vmem:[#allocation2 + $0x2c] sm:$0xf]
    %v157 = vld [vmem:[#allocation2 + $0x30] sm:$0xf]
    %v158 = vld [vmem:[#allocation2 + $0x34] sm:$0xf]
    %v159 = vld [vmem:[#allocation2 + $0x38] sm:$0xf]
    %v160 = vld [vmem:[#allocation2 + $0x3c] sm:$0xf]
    %v161 = vld [vmem:[#allocation2 + $0x40] sm:$0xf]
    %v162 = vld [vmem:[#allocation2 + $0x44] sm:$0xf]
    %v163 = vld [vmem:[#allocation2 + $0x48] sm:$0xf]
    %v164 = vld [vmem:[#allocation2 + $0x4c] sm:$0xf]
    %v165 = vld [vmem:[#allocation2 + $0x50] sm:$0xf]
    %v166 = vld [vmem:[#allocation2 + $0x54] sm:$0xf]
    %v167 = vld [vmem:[#allocation2 + $0x58] sm:$0xf]
    %v168 = vld [vmem:[#allocation2 + $0x5c] sm:$0xf]
    %v169 = vld [vmem:[#allocation2 + $0x60] sm:$0xf]
    %v170 = vld [vmem:[#allocation2 + $0x64] sm:$0xf]
    %v171 = vld [vmem:[#allocation2 + $0x68] sm:$0xf]
    %v172 = vld [vmem:[#allocation2 + $0x6c] sm:$0xf]
    %v173 = vld [vmem:[#allocation2 + $0x70] sm:$0xf]
    %v174 = vld [vmem:[#allocation2 + $0x74] sm:$0xf]
    %v175 = vld [vmem:[#allocation2 + $0x78] sm:$0xf]
    %v176 = vld [vmem:[#allocation2 + $0x7c] sm:$0xf]
    %v177 = vld [vmem:[#allocation2 + $0x80] sm:$0xf]
    %v178 = vld [vmem:[#allocation2 + $0x84] sm:$0xf]
    %v179 = vld [vmem:[#allocation2 + $0x88] sm:$0xf]
    %v180 = vld [vmem:[#allocation2 + $0x8c] sm:$0xf]
    %v181 = vld [vmem:[#allocation2 + $0x90] sm:$0xf]
    %v182 = vld [vmem:[#allocation2 + $0x94] sm:$0xf]
    %v183 = vld [vmem:[#allocation2 + $0x98] sm:$0xf]
    %v184 = vld [vmem:[#allocation2 + $0x9c] sm:$0xf]
    %v185 = vld [vmem:[#allocation2 + $0xa0] sm:$0xf]
    %v186 = vld [vmem:[#allocation2 + $0xa4] sm:$0xf]
    %v187 = vld [vmem:[#allocation2 + $0xa8] sm:$0xf]
    %v188 = vld [vmem:[#allocation2 + $0xac] sm:$0xf]
    %v189 = vld [vmem:[#allocation2 + $0xb0] sm:$0xf]
    %v190 = vld [vmem:[#allocation2 + $0xb4] sm:$0xf]
    %v191 = vld [vmem:[#allocation2 + $0xb8] sm:$0xf]
    %v192 = vld [vmem:[#allocation2 + $0xbc] sm:$0xf]
    %v193 = vld [vmem:[#allocation2 + $0xc0] sm:$0xf]
    %v194 = vld [vmem:[#allocation2 + $0xc4] sm:$0xf]
    %v195 = vld [vmem:[#allocation2 + $0xc8] sm:$0xf]
    %v196 = vld [vmem:[#allocation2 + $0xcc] sm:$0xf]
    %v197 = vld [vmem:[#allocation2 + $0xd0] sm:$0xf]
    %v198 = vld [vmem:[#allocation2 + $0xd4] sm:$0xf]
    %v199 = vld [vmem:[#allocation2 + $0xd8] sm:$0xf]
    %v200 = vld [vmem:[#allocation2 + $0xdc] sm:$0xf]
    %v201 = vld [vmem:[#allocation2 + $0xe0] sm:$0xf]
    %v202 = vld [vmem:[#allocation2 + $0xe4] sm:$0xf]
    %v203 = vld [vmem:[#allocation2 + $0xe8] sm:$0xf]
    %v204 = vld [vmem:[#allocation2 + $0xec] sm:$0xf]
    %v205 = vld [vmem:[#allocation2 + $0xf0] sm:$0xf]
    %v206 = vld [vmem:[#allocation2 + $0xf4] sm:$0xf]
    %v207 = vld [vmem:[#allocation2 + $0xf8] sm:$0xf]
    %v208 = vld [vmem:[#allocation2 + $0xfc] sm:$0xf]
    %v209 = vld [vmem:[#allocation2 + $0x100] sm:$0xf]
    %v210 = vld [vmem:[#allocation2 + $0x104] sm:$0xf]
    %v211 = vld [vmem:[#allocation2 + $0x108] sm:$0xf]
    %v212 = vld [vmem:[#allocation2 + $0x10c] sm:$0xf]
    %v213 = vld [vmem:[#allocation2 + $0x110] sm:$0xf]
    %v214 = vld [vmem:[#allocation2 + $0x114] sm:$0xf]
    %v215 = vld [vmem:[#allocation2 + $0x118] sm:$0xf]
    %v216 = vld [vmem:[#allocation2 + $0x11c] sm:$0xf]
    %v217 = vld [vmem:[#allocation2 + $0x120] sm:$0xf]
    %v218 = vld [vmem:[#allocation2 + $0x124] sm:$0xf]
    %v219 = vld [vmem:[#allocation2 + $0x128] sm:$0xf]
    %v220 = vld [vmem:[#allocation2 + $0x12c] sm:$0xf]
    %v221 = vld [vmem:[#allocation2 + $0x130] sm:$0xf]
    %v222 = vld [vmem:[#allocation2 + $0x134] sm:$0xf]
    %v223 = vld [vmem:[#allocation2 + $0x138] sm:$0xf]
    %v224 = vld [vmem:[#allocation2 + $0x13c] sm:$0xf]
    %v225 = vld [vmem:[#allocation2 + $0x140] sm:$0xf]
    %v226 = vld [vmem:[#allocation2 + $0x144] sm:$0xf]
    %v227 = vld [vmem:[#allocation2 + $0x148] sm:$0xf]
    %v228 = vld [vmem:[#allocation2 + $0x14c] sm:$0xf]
    %v229 = vld [vmem:[#allocation2 + $0x150] sm:$0xf]
    %v230 = vld [vmem:[#allocation2 + $0x154] sm:$0xf]
    %v231 = vld [vmem:[#allocation2 + $0x158] sm:$0xf]
    %v232 = vld [vmem:[#allocation2 + $0x15c] sm:$0xf]
    %v233 = vld [vmem:[#allocation2 + $0x160] sm:$0xf]
    %v234 = vld [vmem:[#allocation2 + $0x164] sm:$0xf]
    %v235 = vld [vmem:[#allocation2 + $0x168] sm:$0xf]
    %v236 = vld [vmem:[#allocation2 + $0x16c] sm:$0xf]
    %v237 = vld [vmem:[#allocation2 + $0x170] sm:$0xf]
    %v238 = vld [vmem:[#allocation2 + $0x174] sm:$0xf]
    %v239 = vld [vmem:[#allocation2 + $0x178] sm:$0xf]
    %v240 = vld [vmem:[#allocation2 + $0x17c] sm:$0xf]
    %v241 = vld [vmem:[#allocation2 + $0x180] sm:$0xf]
    %v242 = vld [vmem:[#allocation2 + $0x184] sm:$0xf]
    %v243 = vld [vmem:[#allocation2 + $0x188] sm:$0xf]
    %v244 = vld [vmem:[#allocation2 + $0x18c] sm:$0xf]
    %v245 = vld [vmem:[#allocation2 + $0x190] sm:$0xf]
    %v246 = vld [vmem:[#allocation2 + $0x194] sm:$0xf]
    %v247 = vld [vmem:[#allocation2 + $0x198] sm:$0xf]
    %v248 = vld [vmem:[#allocation2 + $0x19c] sm:$0xf]
    %v249 = vld [vmem:[#allocation2 + $0x1a0] sm:$0xf]
    %v250 = vld [vmem:[#allocation2 + $0x1a4] sm:$0xf]
    %v251 = vld [vmem:[#allocation2 + $0x1a8] sm:$0xf]
    %v252 = vld [vmem:[#allocation2 + $0x1ac] sm:$0xf]
    %v253 = vld [vmem:[#allocation2 + $0x1b0] sm:$0xf]
    %v254 = vld [vmem:[#allocation2 + $0x1b4] sm:$0xf]
    %v255 = vld [vmem:[#allocation2 + $0x1b8] sm:$0xf]
    %v256 = vld [vmem:[#allocation2 + $0x1bc] sm:$0xf]
    %v257 = vld [vmem:[#allocation2 + $0x1c0] sm:$0xf]
    %v258 = vld [vmem:[#allocation2 + $0x1c4] sm:$0xf]
    %v259 = vld [vmem:[#allocation2 + $0x1c8] sm:$0xf]
    %v260 = vld [vmem:[#allocation2 + $0x1cc] sm:$0xf]
    %v261 = vld [vmem:[#allocation2 + $0x1d0] sm:$0xf]
    %v262 = vld [vmem:[#allocation2 + $0x1d4] sm:$0xf]
    %v263 = vld [vmem:[#allocation2 + $0x1d8] sm:$0xf]
    %v264 = vld [vmem:[#allocation2 + $0x1dc] sm:$0xf]
    %v265 = vld [vmem:[#allocation2 + $0x1e0] sm:$0xf]
    %v266 = vld [vmem:[#allocation2 + $0x1e4] sm:$0xf]
    %v267 = vld [vmem:[#allocation2 + $0x1e8] sm:$0xf]
    %v268 = vld [vmem:[#allocation2 + $0x1ec] sm:$0xf]
    %v269 = vld [vmem:[#allocation2 + $0x1f0] sm:$0xf]
    %v270 = vld [vmem:[#allocation2 + $0x1f4] sm:$0xf]
    %v271 = vld [vmem:[#allocation2 + $0x1f8] sm:$0xf]
    %v272 = vld [vmem:[#allocation2 + $0x1fc] sm:$0xf]
    %v273 = vld [vmem:[%s3] sm:$0x1]
    %v275 = vlaneseq
    %v276 = vshrl.u32 %v275, 7
    %v277 = vsub.s32 0, %v276
    %v278 = vrot.slane %v273, %v277
    %v408 = vunpack.c.l.b16 %v145
    %v409 = vunpack.c.l.b16 %v146
    %v410 = vunpack.c.l.b16 %v147
    %v411 = vunpack.c.l.b16 %v148
    %v412 = vunpack.c.l.b16 %v149
    %v413 = vunpack.c.l.b16 %v150
    %v414 = vunpack.c.l.b16 %v151
    %v415 = vunpack.c.l.b16 %v152
    %v416 = vunpack.c.l.b16 %v153
    %v417 = vunpack.c.l.b16 %v154
    %v418 = vunpack.c.l.b16 %v155
    %v419 = vunpack.c.l.b16 %v156
    %v420 = vunpack.c.l.b16 %v157
    %v421 = vunpack.c.l.b16 %v158
    %v422 = vunpack.c.l.b16 %v159
    %v423 = vunpack.c.l.b16 %v160
    %v424 = vunpack.c.l.b16 %v161
    %v425 = vunpack.c.l.b16 %v162
    %v426 = vunpack.c.l.b16 %v163
    %v427 = vunpack.c.l.b16 %v164
    %v428 = vunpack.c.l.b16 %v165
    %v429 = vunpack.c.l.b16 %v166
    %v430 = vunpack.c.l.b16 %v167
    %v431 = vunpack.c.l.b16 %v168
    %v432 = vunpack.c.l.b16 %v169
    %v433 = vunpack.c.l.b16 %v170
    %v434 = vunpack.c.l.b16 %v171
    %v435 = vunpack.c.l.b16 %v172
    %v436 = vunpack.c.l.b16 %v173
    %v437 = vunpack.c.l.b16 %v174
    %v438 = vunpack.c.l.b16 %v175
    %v439 = vunpack.c.l.b16 %v176
    %v440 = vunpack.c.l.b16 %v177
    %v441 = vunpack.c.l.b16 %v178
    %v442 = vunpack.c.l.b16 %v179
    %v443 = vunpack.c.l.b16 %v180
    %v444 = vunpack.c.l.b16 %v181
    %v445 = vunpack.c.l.b16 %v182
    %v446 = vunpack.c.l.b16 %v183
    %v447 = vunpack.c.l.b16 %v184
    %v448 = vunpack.c.l.b16 %v185
    %v449 = vunpack.c.l.b16 %v186
    %v450 = vunpack.c.l.b16 %v187
    %v451 = vunpack.c.l.b16 %v188
    %v452 = vunpack.c.l.b16 %v189
    %v453 = vunpack.c.l.b16 %v190
    %v454 = vunpack.c.l.b16 %v191
    %v455 = vunpack.c.l.b16 %v192
    %v456 = vunpack.c.l.b16 %v193
    %v457 = vunpack.c.l.b16 %v194
    %v458 = vunpack.c.l.b16 %v195
    %v459 = vunpack.c.l.b16 %v196
    %v460 = vunpack.c.l.b16 %v197
    %v461 = vunpack.c.l.b16 %v198
    %v462 = vunpack.c.l.b16 %v199
    %v463 = vunpack.c.l.b16 %v200
    %v464 = vunpack.c.l.b16 %v201
    %v465 = vunpack.c.l.b16 %v202
    %v466 = vunpack.c.l.b16 %v203
    %v467 = vunpack.c.l.b16 %v204
    %v468 = vunpack.c.l.b16 %v205
    %v469 = vunpack.c.l.b16 %v206
    %v470 = vunpack.c.l.b16 %v207
    %v471 = vunpack.c.l.b16 %v208
    %v472 = vunpack.c.l.b16 %v209
    %v473 = vunpack.c.l.b16 %v210
    %v474 = vunpack.c.l.b16 %v211
    %v475 = vunpack.c.l.b16 %v212
    %v476 = vunpack.c.l.b16 %v213
    %v477 = vunpack.c.l.b16 %v214
    %v478 = vunpack.c.l.b16 %v215
    %v479 = vunpack.c.l.b16 %v216
    %v480 = vunpack.c.l.b16 %v217
    %v481 = vunpack.c.l.b16 %v218
    %v482 = vunpack.c.l.b16 %v219
    %v483 = vunpack.c.l.b16 %v220
    %v484 = vunpack.c.l.b16 %v221
    %v485 = vunpack.c.l.b16 %v222
    %v486 = vunpack.c.l.b16 %v223
    %v487 = vunpack.c.l.b16 %v224
    %v488 = vunpack.c.l.b16 %v225
    %v489 = vunpack.c.l.b16 %v226
    %v490 = vunpack.c.l.b16 %v227
    %v491 = vunpack.c.l.b16 %v228
    %v492 = vunpack.c.l.b16 %v229
    %v493 = vunpack.c.l.b16 %v230
    %v494 = vunpack.c.l.b16 %v231
    %v495 = vunpack.c.l.b16 %v232
    %v496 = vunpack.c.l.b16 %v233
    %v497 = vunpack.c.l.b16 %v234
    %v498 = vunpack.c.l.b16 %v235
    %v499 = vunpack.c.l.b16 %v236
    %v500 = vunpack.c.l.b16 %v237
    %v501 = vunpack.c.l.b16 %v238
    %v502 = vunpack.c.l.b16 %v239
    %v503 = vunpack.c.l.b16 %v240
    %v504 = vunpack.c.l.b16 %v241
    %v505 = vunpack.c.l.b16 %v242
    %v506 = vunpack.c.l.b16 %v243
    %v507 = vunpack.c.l.b16 %v244
    %v508 = vunpack.c.l.b16 %v245
    %v509 = vunpack.c.l.b16 %v246
    %v510 = vunpack.c.l.b16 %v247
    %v511 = vunpack.c.l.b16 %v248
    %v512 = vunpack.c.l.b16 %v249
    %v513 = vunpack.c.l.b16 %v250
    %v514 = vunpack.c.l.b16 %v251
    %v515 = vunpack.c.l.b16 %v252
    %v516 = vunpack.c.l.b16 %v253
    %v517 = vunpack.c.l.b16 %v254
    %v518 = vunpack.c.l.b16 %v255
    %v519 = vunpack.c.l.b16 %v256
    %v520 = vunpack.c.l.b16 %v257
    %v521 = vunpack.c.l.b16 %v258
    %v522 = vunpack.c.l.b16 %v259
    %v523 = vunpack.c.l.b16 %v260
    %v524 = vunpack.c.l.b16 %v261
    %v525 = vunpack.c.l.b16 %v262
    %v526 = vunpack.c.l.b16 %v263
    %v527 = vunpack.c.l.b16 %v264
    %v528 = vunpack.c.l.b16 %v265
    %v529 = vunpack.c.l.b16 %v266
    %v530 = vunpack.c.l.b16 %v267
    %v531 = vunpack.c.l.b16 %v268
    %v532 = vunpack.c.l.b16 %v269
    %v533 = vunpack.c.l.b16 %v270
    %v534 = vunpack.c.l.b16 %v271
    %v535 = vunpack.c.l.b16 %v272
    %v536 = vpack.c.b16 %v409, %v408
    %v537 = vpack.c.b16 %v411, %v410
    %v538 = vpack.c.b16 %v413, %v412
    %v539 = vpack.c.b16 %v415, %v414
    %v540 = vpack.c.b16 %v417, %v416
    %v541 = vpack.c.b16 %v419, %v418
    %v542 = vpack.c.b16 %v421, %v420
    %v543 = vpack.c.b16 %v423, %v422
    %v544 = vpack.c.b16 %v425, %v424
    %v545 = vpack.c.b16 %v427, %v426
    %v546 = vpack.c.b16 %v429, %v428
    %v547 = vpack.c.b16 %v431, %v430
    %v548 = vpack.c.b16 %v433, %v432
    %v549 = vpack.c.b16 %v435, %v434
    %v550 = vpack.c.b16 %v437, %v436
    %v551 = vpack.c.b16 %v439, %v438
    %v552 = vpack.c.b16 %v441, %v440
    %v553 = vpack.c.b16 %v443, %v442
    %v554 = vpack.c.b16 %v445, %v444
    %v555 = vpack.c.b16 %v447, %v446
    %v556 = vpack.c.b16 %v449, %v448
    %v557 = vpack.c.b16 %v451, %v450
    %v558 = vpack.c.b16 %v453, %v452
    %v559 = vpack.c.b16 %v455, %v454
    %v560 = vpack.c.b16 %v457, %v456
    %v561 = vpack.c.b16 %v459, %v458
    %v562 = vpack.c.b16 %v461, %v460
    %v563 = vpack.c.b16 %v463, %v462
    %v564 = vpack.c.b16 %v465, %v464
    %v565 = vpack.c.b16 %v467, %v466
    %v566 = vpack.c.b16 %v469, %v468
    %v567 = vpack.c.b16 %v471, %v470
    %v568 = vpack.c.b16 %v473, %v472
    %v569 = vpack.c.b16 %v475, %v474
    %v570 = vpack.c.b16 %v477, %v476
    %v571 = vpack.c.b16 %v479, %v478
    %v572 = vpack.c.b16 %v481, %v480
    %v573 = vpack.c.b16 %v483, %v482
    %v574 = vpack.c.b16 %v485, %v484
    %v575 = vpack.c.b16 %v487, %v486
    %v576 = vpack.c.b16 %v489, %v488
    %v577 = vpack.c.b16 %v491, %v490
    %v578 = vpack.c.b16 %v493, %v492
    %v579 = vpack.c.b16 %v495, %v494
    %v580 = vpack.c.b16 %v497, %v496
    %v581 = vpack.c.b16 %v499, %v498
    %v582 = vpack.c.b16 %v501, %v500
    %v583 = vpack.c.b16 %v503, %v502
    %v584 = vpack.c.b16 %v505, %v504
    %v585 = vpack.c.b16 %v507, %v506
    %v586 = vpack.c.b16 %v509, %v508
    %v587 = vpack.c.b16 %v511, %v510
    %v588 = vpack.c.b16 %v513, %v512
    %v589 = vpack.c.b16 %v515, %v514
    %v590 = vpack.c.b16 %v517, %v516
    %v591 = vpack.c.b16 %v519, %v518
    %v592 = vpack.c.b16 %v521, %v520
    %v593 = vpack.c.b16 %v523, %v522
    %v594 = vpack.c.b16 %v525, %v524
    %v595 = vpack.c.b16 %v527, %v526
    %v596 = vpack.c.b16 %v529, %v528
    %v597 = vpack.c.b16 %v531, %v530
    %v598 = vpack.c.b16 %v533, %v532
    %v599 = vpack.c.b16 %v535, %v534
    %664 = vmatprep.subr.bf16.mxu0 0
    %665 = vmatpush1.bf16.msra.mxu0 %v536
    %666 = vmatprep.subr.bf16.mxu0 0
    %667 = vmatpush1.bf16.msra.mxu0 %v537
    %668 = vmatprep.subr.bf16.mxu0 0
    %669 = vmatpush1.bf16.msra.mxu0 %v538
    %670 = vmatprep.subr.bf16.mxu0 0
    %671 = vmatpush1.bf16.msra.mxu0 %v539
    %672 = vmatprep.subr.bf16.mxu0 0
    %673 = vmatpush1.bf16.msra.mxu0 %v540
    %674 = vmatprep.subr.bf16.mxu0 0
    %675 = vmatpush1.bf16.msra.mxu0 %v541
    %676 = vmatprep.subr.bf16.mxu0 0
    %677 = vmatpush1.bf16.msra.mxu0 %v542
    %678 = vmatprep.subr.bf16.mxu0 0
    %679 = vmatpush1.bf16.msra.mxu0 %v543
    %680 = vmatprep.subr.bf16.mxu0 0
    %681 = vmatpush1.bf16.msra.mxu0 %v544
    %682 = vmatprep.subr.bf16.mxu0 0
    %683 = vmatpush1.bf16.msra.mxu0 %v545
    %684 = vmatprep.subr.bf16.mxu0 0
    %685 = vmatpush1.bf16.msra.mxu0 %v546
    %686 = vmatprep.subr.bf16.mxu0 0
    %687 = vmatpush1.bf16.msra.mxu0 %v547
    %688 = vmatprep.subr.bf16.mxu0 0
    %689 = vmatpush1.bf16.msra.mxu0 %v548
    %690 = vmatprep.subr.bf16.mxu0 0
    %691 = vmatpush1.bf16.msra.mxu0 %v549
    %692 = vmatprep.subr.bf16.mxu0 0
    %693 = vmatpush1.bf16.msra.mxu0 %v550
    %694 = vmatprep.subr.bf16.mxu0 0
    %695 = vmatpush1.bf16.msra.mxu0 %v551
    %696 = vmatprep.mubr.bf16.mxu0 %v138
    %697 = vmatmul.mubr.bf16.gmra.mrb[0].mxu0 %v137
    %v698 = vpop.f32.mrb[0].mxu0
    %v699 = vadd.f32 %v278, %v698
    %v700 = vpop.f32.mrb[0].mxu0
    %v701 = vpop.f32.mrb[0].mxu0
    %v702 = vpop.f32.mrb[0].mxu0
    %703 = vdwg.mxu0
    %704 = vmatprep.subr.bf16.mxu0 0
    %705 = vmatpush1.bf16.msra.mxu0 %v552
    %706 = vmatprep.subr.bf16.mxu0 0
    %707 = vmatpush1.bf16.msra.mxu0 %v553
    %708 = vmatprep.subr.bf16.mxu0 0
    %709 = vmatpush1.bf16.msra.mxu0 %v554
    %710 = vmatprep.subr.bf16.mxu0 0
    %711 = vmatpush1.bf16.msra.mxu0 %v555
    %712 = vmatprep.subr.bf16.mxu0 0
    %713 = vmatpush1.bf16.msra.mxu0 %v556
    %714 = vmatprep.subr.bf16.mxu0 0
    %715 = vmatpush1.bf16.msra.mxu0 %v557
    %716 = vmatprep.subr.bf16.mxu0 0
    %717 = vmatpush1.bf16.msra.mxu0 %v558
    %718 = vmatprep.subr.bf16.mxu0 0
    %719 = vmatpush1.bf16.msra.mxu0 %v559
    %720 = vmatprep.subr.bf16.mxu0 0
    %721 = vmatpush1.bf16.msra.mxu0 %v560
    %722 = vmatprep.subr.bf16.mxu0 0
    %723 = vmatpush1.bf16.msra.mxu0 %v561
    %724 = vmatprep.subr.bf16.mxu0 0
    %725 = vmatpush1.bf16.msra.mxu0 %v562
    %726 = vmatprep.subr.bf16.mxu0 0
    %727 = vmatpush1.bf16.msra.mxu0 %v563
    %728 = vmatprep.subr.bf16.mxu0 0
    %729 = vmatpush1.bf16.msra.mxu0 %v564
    %730 = vmatprep.subr.bf16.mxu0 0
    %731 = vmatpush1.bf16.msra.mxu0 %v565
    %732 = vmatprep.subr.bf16.mxu0 0
    %733 = vmatpush1.bf16.msra.mxu0 %v566
    %734 = vmatprep.subr.bf16.mxu0 0
    %735 = vmatpush1.bf16.msra.mxu0 %v567
    %736 = vmatprep.mubr.bf16.mxu0 %v140
    %737 = vmatmul.mubr.bf16.gmra.mrb[0].mxu0 %v139
    %v738 = vpop.f32.mrb[0].mxu0
    %v739 = vadd.f32 %v699, %v738
    %v740 = vpop.f32.mrb[0].mxu0
    %v741 = vpop.f32.mrb[0].mxu0
    %v742 = vpop.f32.mrb[0].mxu0
    %743 = vdwg.mxu0
    %744 = vmatprep.subr.bf16.mxu0 0
    %745 = vmatpush1.bf16.msra.mxu0 %v568
    %746 = vmatprep.subr.bf16.mxu0 0
    %747 = vmatpush1.bf16.msra.mxu0 %v569
    %748 = vmatprep.subr.bf16.mxu0 0
    %749 = vmatpush1.bf16.msra.mxu0 %v570
    %750 = vmatprep.subr.bf16.mxu0 0
    %751 = vmatpush1.bf16.msra.mxu0 %v571
    %752 = vmatprep.subr.bf16.mxu0 0
    %753 = vmatpush1.bf16.msra.mxu0 %v572
    %754 = vmatprep.subr.bf16.mxu0 0
    %755 = vmatpush1.bf16.msra.mxu0 %v573
    %756 = vmatprep.subr.bf16.mxu0 0
    %757 = vmatpush1.bf16.msra.mxu0 %v574
    %758 = vmatprep.subr.bf16.mxu0 0
    %759 = vmatpush1.bf16.msra.mxu0 %v575
    %760 = vmatprep.subr.bf16.mxu0 0
    %761 = vmatpush1.bf16.msra.mxu0 %v576
    %762 = vmatprep.subr.bf16.mxu0 0
    %763 = vmatpush1.bf16.msra.mxu0 %v577
    %764 = vmatprep.subr.bf16.mxu0 0
    %765 = vmatpush1.bf16.msra.mxu0 %v578
    %766 = vmatprep.subr.bf16.mxu0 0
    %767 = vmatpush1.bf16.msra.mxu0 %v579
    %768 = vmatprep.subr.bf16.mxu0 0
    %769 = vmatpush1.bf16.msra.mxu0 %v580
    %770 = vmatprep.subr.bf16.mxu0 0
    %771 = vmatpush1.bf16.msra.mxu0 %v581
    %772 = vmatprep.subr.bf16.mxu0 0
    %773 = vmatpush1.bf16.msra.mxu0 %v582
    %774 = vmatprep.subr.bf16.mxu0 0
    %775 = vmatpush1.bf16.msra.mxu0 %v583
    %776 = vmatprep.mubr.bf16.mxu0 %v142
    %777 = vmatmul.mubr.bf16.gmra.mrb[0].mxu0 %v141
    %v778 = vpop.f32.mrb[0].mxu0
    %v779 = vadd.f32 %v739, %v778
    %v780 = vpop.f32.mrb[0].mxu0
    %v781 = vpop.f32.mrb[0].mxu0
    %v782 = vpop.f32.mrb[0].mxu0
    %783 = vdwg.mxu0
    %784 = vmatprep.subr.bf16.mxu0 0
    %785 = vmatpush1.bf16.msra.mxu0 %v584
    %786 = vmatprep.subr.bf16.mxu0 0
    %787 = vmatpush1.bf16.msra.mxu0 %v585
    %788 = vmatprep.subr.bf16.mxu0 0
    %789 = vmatpush1.bf16.msra.mxu0 %v586
    %790 = vmatprep.subr.bf16.mxu0 0
    %791 = vmatpush1.bf16.msra.mxu0 %v587
    %792 = vmatprep.subr.bf16.mxu0 0
    %793 = vmatpush1.bf16.msra.mxu0 %v588
    %794 = vmatprep.subr.bf16.mxu0 0
    %795 = vmatpush1.bf16.msra.mxu0 %v589
    %796 = vmatprep.subr.bf16.mxu0 0
    %797 = vmatpush1.bf16.msra.mxu0 %v590
    %798 = vmatprep.subr.bf16.mxu0 0
    %799 = vmatpush1.bf16.msra.mxu0 %v591
    %800 = vmatprep.subr.bf16.mxu0 0
    %801 = vmatpush1.bf16.msra.mxu0 %v592
    %802 = vmatprep.subr.bf16.mxu0 0
    %803 = vmatpush1.bf16.msra.mxu0 %v593
    %804 = vmatprep.subr.bf16.mxu0 0
    %805 = vmatpush1.bf16.msra.mxu0 %v594
    %806 = vmatprep.subr.bf16.mxu0 0
    %807 = vmatpush1.bf16.msra.mxu0 %v595
    %808 = vmatprep.subr.bf16.mxu0 0
    %809 = vmatpush1.bf16.msra.mxu0 %v596
    %810 = vmatprep.subr.bf16.mxu0 0
    %811 = vmatpush1.bf16.msra.mxu0 %v597
    %812 = vmatprep.subr.bf16.mxu0 0
    %813 = vmatpush1.bf16.msra.mxu0 %v598
    %814 = vmatprep.subr.bf16.mxu0 0
    %815 = vmatpush1.bf16.msra.mxu0 %v599
    %816 = vmatprep.mubr.bf16.mxu0 %v144
    %817 = vmatmul.mubr.bf16.gmra.mrb[0].mxu0 %v143
    %v818 = vpop.f32.mrb[0].mxu0
    %v819 = vadd.f32 %v779, %v818
    %v820 = vpop.f32.mrb[0].mxu0
    %v821 = vpop.f32.mrb[0].mxu0
    %v822 = vpop.f32.mrb[0].mxu0
    %823 = vdwg.mxu0
    %v824 = vmax.f32 %v819, 0.0
    %v825 = vpack.c.bf16 %v824, %v824
    %v826 = vld [vmem:[%s4] sm:$0xf]
    %v827 = vld [vmem:[%s4 + $0x4] sm:$0xf]
    %v828 = vld [vmem:[%s4 + $0x8] sm:$0xf]
    %v829 = vld [vmem:[%s4 + $0xc] sm:$0xf]
    %v830 = vld [vmem:[%s4 + $0x10] sm:$0xf]
    %v831 = vld [vmem:[%s4 + $0x14] sm:$0xf]
    %v832 = vld [vmem:[%s4 + $0x18] sm:$0xf]
    %v833 = vld [vmem:[%s4 + $0x1c] sm:$0xf]
    %v834 = vld [vmem:[%s4 + $0x20] sm:$0xf]
    %v835 = vld [vmem:[%s4 + $0x24] sm:$0xf]
    %v836 = vld [vmem:[%s4 + $0x28] sm:$0xf]
    %v837 = vld [vmem:[%s4 + $0x2c] sm:$0xf]
    %v838 = vld [vmem:[%s4 + $0x30] sm:$0xf]
    %v839 = vld [vmem:[%s4 + $0x34] sm:$0xf]
    %v840 = vld [vmem:[%s4 + $0x38] sm:$0xf]
    %v841 = vld [vmem:[%s4 + $0x3c] sm:$0xf]
    %v842 = vld [vmem:[%s5] sm:$0x1]
    %v844 = vlaneseq
    %v845 = vshrl.u32 %v844, 7
    %v846 = vsub.s32 0, %v845
    %v847 = vrot.slane %v842, %v846
    %v865 = vunpack.c.l.b16 %v826
    %v866 = vunpack.c.l.b16 %v827
    %v867 = vunpack.c.l.b16 %v828
    %v868 = vunpack.c.l.b16 %v829
    %v869 = vunpack.c.l.b16 %v830
    %v870 = vunpack.c.l.b16 %v831
    %v871 = vunpack.c.l.b16 %v832
    %v872 = vunpack.c.l.b16 %v833
    %v873 = vunpack.c.l.b16 %v834
    %v874 = vunpack.c.l.b16 %v835
    %v875 = vunpack.c.l.b16 %v836
    %v876 = vunpack.c.l.b16 %v837
    %v877 = vunpack.c.l.b16 %v838
    %v878 = vunpack.c.l.b16 %v839
    %v879 = vunpack.c.l.b16 %v840
    %v880 = vunpack.c.l.b16 %v841
    %v881 = vpack.c.b16 %v866, %v865
    %v882 = vpack.c.b16 %v868, %v867
    %v883 = vpack.c.b16 %v870, %v869
    %v884 = vpack.c.b16 %v872, %v871
    %v885 = vpack.c.b16 %v874, %v873
    %v886 = vpack.c.b16 %v876, %v875
    %v887 = vpack.c.b16 %v878, %v877
    %v888 = vpack.c.b16 %v880, %v879
    %897 = vmatprep.subr.bf16.mxu0 0
    %898 = vmatpush1.bf16.msra.mxu0 %v881
    %899 = vmatprep.subr.bf16.mxu0 0
    %900 = vmatpush1.bf16.msra.mxu0 %v882
    %901 = vmatprep.subr.bf16.mxu0 0
    %902 = vmatpush1.bf16.msra.mxu0 %v883
    %903 = vmatprep.subr.bf16.mxu0 0
    %904 = vmatpush1.bf16.msra.mxu0 %v884
    %905 = vmatprep.subr.bf16.mxu0 0
    %906 = vmatpush1.bf16.msra.mxu0 %v885
    %907 = vmatprep.subr.bf16.mxu0 0
    %908 = vmatpush1.bf16.msra.mxu0 %v886
    %909 = vmatprep.subr.bf16.mxu0 0
    %910 = vmatpush1.bf16.msra.mxu0 %v887
    %911 = vmatprep.subr.bf16.mxu0 0
    %912 = vmatpush1.bf16.msra.mxu0 %v888
    %913 = vmatprep.subr.bf16.mxu0 0
    %914 = vmatpush1.bf16.msra.mxu0 0
    %915 = vmatprep.subr.bf16.mxu0 0
    %916 = vmatpush1.bf16.msra.mxu0 0
    %917 = vmatprep.subr.bf16.mxu0 0
    %918 = vmatpush1.bf16.msra.mxu0 0
    %919 = vmatprep.subr.bf16.mxu0 0
    %920 = vmatpush1.bf16.msra.mxu0 0
    %921 = vmatprep.subr.bf16.mxu0 0
    %922 = vmatpush1.bf16.msra.mxu0 0
    %923 = vmatprep.subr.bf16.mxu0 0
    %924 = vmatpush1.bf16.msra.mxu0 0
    %925 = vmatprep.subr.bf16.mxu0 0
    %926 = vmatpush1.bf16.msra.mxu0 0
    %927 = vmatprep.subr.bf16.mxu0 0
    %928 = vmatpush1.bf16.msra.mxu0 0
    %929 = vmatprep.mubr.bf16.mxu0 0
    %930 = vmatmul.mubr.bf16.gmra.mrb[0].mxu0 %v825
    %v931 = vpop.f32.mrb[0].mxu0
    %v932 = vadd.f32 %v847, %v931
    %v933 = vpop.f32.mrb[0].mxu0
    %v934 = vpop.f32.mrb[0].mxu0
    %v935 = vpop.f32.mrb[0].mxu0
    %936 = vdwg.mxu0
    %v937 = vld [vmem:[%s6] sm:$0xf]
    %v938 = vld [vmem:[%s6 + $0x4] sm:$0xf]
    %v939 = vld [vmem:[%s6 + $0x8] sm:$0xf]
    %v940 = vld [vmem:[%s6 + $0xc] sm:$0xf]
    %v941 = vld [vmem:[%s6 + $0x10] sm:$0xf]
    %v942 = vld [vmem:[%s6 + $0x14] sm:$0xf]
    %v943 = vld [vmem:[%s6 + $0x18] sm:$0xf]
    %v944 = vld [vmem:[%s6 + $0x1c] sm:$0xf]
    %v945 = vld [vmem:[%s6 + $0x20] sm:$0xf]
    %v946 = vld [vmem:[%s6 + $0x24] sm:$0xf]
    %v947 = vld [vmem:[%s6 + $0x28] sm:$0xf]
    %v948 = vld [vmem:[%s6 + $0x2c] sm:$0xf]
    %v949 = vld [vmem:[%s6 + $0x30] sm:$0xf]
    %v950 = vld [vmem:[%s6 + $0x34] sm:$0xf]
    %v951 = vld [vmem:[%s6 + $0x38] sm:$0xf]
    %v952 = vld [vmem:[%s6 + $0x3c] sm:$0xf]
    %v953 = vld [vmem:[%s7] sm:$0x1]
    %v955 = vlaneseq
    %v956 = vshrl.u32 %v955, 7
    %v957 = vsub.s32 0, %v956
    %v958 = vrot.slane %v953, %v957
    %v976 = vunpack.c.l.b16 %v937
    %v977 = vunpack.c.l.b16 %v938
    %v978 = vunpack.c.l.b16 %v939
    %v979 = vunpack.c.l.b16 %v940
    %v980 = vunpack.c.l.b16 %v941
    %v981 = vunpack.c.l.b16 %v942
    %v982 = vunpack.c.l.b16 %v943
    %v983 = vunpack.c.l.b16 %v944
    %v984 = vunpack.c.l.b16 %v945
    %v985 = vunpack.c.l.b16 %v946
    %v986 = vunpack.c.l.b16 %v947
    %v987 = vunpack.c.l.b16 %v948
    %v988 = vunpack.c.l.b16 %v949
    %v989 = vunpack.c.l.b16 %v950
    %v990 = vunpack.c.l.b16 %v951
    %v991 = vunpack.c.l.b16 %v952
    %v992 = vpack.c.b16 %v977, %v976
    %v993 = vpack.c.b16 %v979, %v978
    %v994 = vpack.c.b16 %v981, %v980
    %v995 = vpack.c.b16 %v983, %v982
    %v996 = vpack.c.b16 %v985, %v984
    %v997 = vpack.c.b16 %v987, %v986
    %v998 = vpack.c.b16 %v989, %v988
    %v999 = vpack.c.b16 %v991, %v990
    %1008 = vmatprep.subr.bf16.mxu0 0
    %1009 = vmatpush1.bf16.msra.mxu0 %v992
    %1010 = vmatprep.subr.bf16.mxu0 0
    %1011 = vmatpush1.bf16.msra.mxu0 %v993
    %1012 = vmatprep.subr.bf16.mxu0 0
    %1013 = vmatpush1.bf16.msra.mxu0 %v994
    %1014 = vmatprep.subr.bf16.mxu0 0
    %1015 = vmatpush1.bf16.msra.mxu0 %v995
    %1016 = vmatprep.subr.bf16.mxu0 0
    %1017 = vmatpush1.bf16.msra.mxu0 %v996
    %1018 = vmatprep.subr.bf16.mxu0 0
    %1019 = vmatpush1.bf16.msra.mxu0 %v997
    %1020 = vmatprep.subr.bf16.mxu0 0
    %1021 = vmatpush1.bf16.msra.mxu0 %v998
    %1022 = vmatprep.subr.bf16.mxu0 0
    %1023 = vmatpush1.bf16.msra.mxu0 %v999
    %1024 = vmatprep.subr.bf16.mxu0 0
    %1025 = vmatpush1.bf16.msra.mxu0 0
    %1026 = vmatprep.subr.bf16.mxu0 0
    %1027 = vmatpush1.bf16.msra.mxu0 0
    %1028 = vmatprep.subr.bf16.mxu0 0
    %1029 = vmatpush1.bf16.msra.mxu0 0
    %1030 = vmatprep.subr.bf16.mxu0 0
    %1031 = vmatpush1.bf16.msra.mxu0 0
    %1032 = vmatprep.subr.bf16.mxu0 0
    %1033 = vmatpush1.bf16.msra.mxu0 0
    %1034 = vmatprep.subr.bf16.mxu0 0
    %1035 = vmatpush1.bf16.msra.mxu0 0
    %1036 = vmatprep.subr.bf16.mxu0 0
    %1037 = vmatpush1.bf16.msra.mxu0 0
    %1038 = vmatprep.subr.bf16.mxu0 0
    %1039 = vmatpush1.bf16.msra.mxu0 0
    %1040 = vmatprep.mubr.bf16.mxu0 0
    %1041 = vmatmul.mubr.bf16.gmra.mrb[0].mxu0 %v825
    %v1042 = vpop.f32.mrb[0].mxu0
    %v1043 = vadd.f32 %v958, %v1042
    %v1044 = vpop.f32.mrb[0].mxu0
    %v1045 = vpop.f32.mrb[0].mxu0
    %v1046 = vpop.f32.mrb[0].mxu0
    %1047 = vdwg.mxu0
    %1048 = vst [vmem:[%s15] sm:$0xff] %v932
    %1049 = vst [vmem:[%s16] sm:$0xff] %v1043
    %v1050 = vmul.f32 %v1043, 0.5
    %v1051 = vmul.f32 %v1050, 1.442695
    %v1052 = vpow.pop %v1051
    %v1053 = vld [vmem:[%s1] sm:$0xff]
    %v1054 = vmul.f32 %v1052, %v1053
    %v1055 = vadd.f32 %v932, %v1054
    %v1056 = vpack.c.bf16 %v1055, %v1055
    %v1057 = vld [vmem:[#allocation4] sm:$0xf]
    %v1058 = vld [vmem:[#allocation4 + $0x4] sm:$0xf]
    %v1059 = vld [vmem:[#allocation4 + $0x8] sm:$0xf]
    %v1060 = vld [vmem:[#allocation4 + $0xc] sm:$0xf]
    %v1061 = vld [vmem:[#allocation4 + $0x10] sm:$0xf]
    %v1062 = vld [vmem:[#allocation4 + $0x14] sm:$0xf]
    %v1063 = vld [vmem:[#allocation4 + $0x18] sm:$0xf]
    %v1064 = vld [vmem:[#allocation4 + $0x1c] sm:$0xf]
    %v1065 = vld [vmem:[#allocation4 + $0x20] sm:$0xf]
    %v1066 = vld [vmem:[#allocation4 + $0x24] sm:$0xf]
    %v1067 = vld [vmem:[#allocation4 + $0x28] sm:$0xf]
    %v1068 = vld [vmem:[#allocation4 + $0x2c] sm:$0xf]
    %v1069 = vld [vmem:[#allocation4 + $0x30] sm:$0xf]
    %v1070 = vld [vmem:[#allocation4 + $0x34] sm:$0xf]
    %v1071 = vld [vmem:[#allocation4 + $0x38] sm:$0xf]
    %v1072 = vld [vmem:[#allocation4 + $0x3c] sm:$0xf]
    %v1073 = vld [vmem:[#allocation6] sm:$0x1]
    %v1075 = vlaneseq
    %v1076 = vshrl.u32 %v1075, 7
    %v1077 = vsub.s32 0, %v1076
    %v1078 = vrot.slane %v1073, %v1077
    %v1096 = vunpack.c.l.b16 %v1057
    %v1097 = vunpack.c.l.b16 %v1058
    %v1098 = vunpack.c.l.b16 %v1059
    %v1099 = vunpack.c.l.b16 %v1060
    %v1100 = vunpack.c.l.b16 %v1061
    %v1101 = vunpack.c.l.b16 %v1062
    %v1102 = vunpack.c.l.b16 %v1063
    %v1103 = vunpack.c.l.b16 %v1064
    %v1104 = vunpack.c.l.b16 %v1065
    %v1105 = vunpack.c.l.b16 %v1066
    %v1106 = vunpack.c.l.b16 %v1067
    %v1107 = vunpack.c.l.b16 %v1068
    %v1108 = vunpack.c.l.b16 %v1069
    %v1109 = vunpack.c.l.b16 %v1070
    %v1110 = vunpack.c.l.b16 %v1071
    %v1111 = vunpack.c.l.b16 %v1072
    %v1112 = vpack.c.b16 %v1097, %v1096
    %v1113 = vpack.c.b16 %v1099, %v1098
    %v1114 = vpack.c.b16 %v1101, %v1100
    %v1115 = vpack.c.b16 %v1103, %v1102
    %v1116 = vpack.c.b16 %v1105, %v1104
    %v1117 = vpack.c.b16 %v1107, %v1106
    %v1118 = vpack.c.b16 %v1109, %v1108
    %v1119 = vpack.c.b16 %v1111, %v1110
    %1128 = vmatprep.subr.bf16.mxu0 0
    %1129 = vmatpush1.bf16.msra.mxu0 %v1112
    %1130 = vmatprep.subr.bf16.mxu0 0
    %1131 = vmatpush1.bf16.msra.mxu0 %v1113
    %1132 = vmatprep.subr.bf16.mxu0 0
    %1133 = vmatpush1.bf16.msra.mxu0 %v1114
    %1134 = vmatprep.subr.bf16.mxu0 0
    %1135 = vmatpush1.bf16.msra.mxu0 %v1115
    %1136 = vmatprep.subr.bf16.mxu0 0
    %1137 = vmatpush1.bf16.msra.mxu0 %v1116
    %1138 = vmatprep.subr.bf16.mxu0 0
    %1139 = vmatpush1.bf16.msra.mxu0 %v1117
    %1140 = vmatprep.subr.bf16.mxu0 0
    %1141 = vmatpush1.bf16.msra.mxu0 %v1118
    %1142 = vmatprep.subr.bf16.mxu0 0
    %1143 = vmatpush1.bf16.msra.mxu0 %v1119
    %1144 = vmatprep.subr.bf16.mxu0 0
    %1145 = vmatpush1.bf16.msra.mxu0 0
    %1146 = vmatprep.subr.bf16.mxu0 0
    %1147 = vmatpush1.bf16.msra.mxu0 0
    %1148 = vmatprep.subr.bf16.mxu0 0
    %1149 = vmatpush1.bf16.msra.mxu0 0
    %1150 = vmatprep.subr.bf16.mxu0 0
    %1151 = vmatpush1.bf16.msra.mxu0 0
    %1152 = vmatprep.subr.bf16.mxu0 0
    %1153 = vmatpush1.bf16.msra.mxu0 0
    %1154 = vmatprep.subr.bf16.mxu0 0
    %1155 = vmatpush1.bf16.msra.mxu0 0
    %1156 = vmatprep.subr.bf16.mxu0 0
    %1157 = vmatpush1.bf16.msra.mxu0 0
    %1158 = vmatprep.subr.bf16.mxu0 0
    %1159 = vmatpush1.bf16.msra.mxu0 0
    %1160 = vmatprep.mubr.bf16.mxu0 0
    %1161 = vmatmul.mubr.bf16.gmra.mrb[0].mxu0 %v1056
    %v1162 = vpop.f32.mrb[0].mxu0
    %v1163 = vadd.f32 %v1078, %v1162
    %v1164 = vpop.f32.mrb[0].mxu0
    %v1165 = vpop.f32.mrb[0].mxu0
    %v1166 = vpop.f32.mrb[0].mxu0
    %1167 = vdwg.mxu0
    %v1168 = vmax.f32 %v1163, 0.0
    %v1169 = vpack.c.bf16 %v1168, %v1168
    %v1170 = vld [vmem:[#allocation7] sm:$0xff]
    %v1171 = vld [vmem:[#allocation7 + $0x8] sm:$0xff]
    %v1172 = vld [vmem:[#allocation7 + $0x10] sm:$0xff]
    %v1173 = vld [vmem:[#allocation7 + $0x18] sm:$0xff]
    %v1174 = vld [vmem:[#allocation7 + $0x20] sm:$0xff]
    %v1175 = vld [vmem:[#allocation7 + $0x28] sm:$0xff]
    %v1176 = vld [vmem:[#allocation7 + $0x30] sm:$0xff]
    %v1177 = vld [vmem:[#allocation7 + $0x38] sm:$0xff]
    %v1178 = vld [vmem:[#allocation7 + $0x40] sm:$0xff]
    %v1179 = vld [vmem:[#allocation7 + $0x48] sm:$0xff]
    %v1180 = vld [vmem:[#allocation7 + $0x50] sm:$0xff]
    %v1181 = vld [vmem:[#allocation7 + $0x58] sm:$0xff]
    %v1182 = vld [vmem:[#allocation7 + $0x60] sm:$0xff]
    %v1183 = vld [vmem:[#allocation7 + $0x68] sm:$0xff]
    %v1184 = vld [vmem:[#allocation7 + $0x70] sm:$0xff]
    %v1185 = vld [vmem:[#allocation7 + $0x78] sm:$0xff]
    %v1186 = vld [vmem:[#allocation7 + $0x80] sm:$0xff]
    %v1187 = vld [vmem:[#allocation7 + $0x88] sm:$0xff]
    %v1188 = vld [vmem:[#allocation7 + $0x90] sm:$0xff]
    %v1189 = vld [vmem:[#allocation7 + $0x98] sm:$0xff]
    %v1190 = vld [vmem:[#allocation7 + $0xa0] sm:$0xff]
    %v1191 = vld [vmem:[#allocation7 + $0xa8] sm:$0xff]
    %v1192 = vld [vmem:[#allocation7 + $0xb0] sm:$0xff]
    %v1193 = vld [vmem:[#allocation7 + $0xb8] sm:$0xff]
    %v1194 = vld [vmem:[#allocation7 + $0xc0] sm:$0xff]
    %v1195 = vld [vmem:[#allocation7 + $0xc8] sm:$0xff]
    %v1196 = vld [vmem:[#allocation7 + $0xd0] sm:$0xff]
    %v1197 = vld [vmem:[#allocation7 + $0xd8] sm:$0xff]
    %v1198 = vld [vmem:[#allocation7 + $0xe0] sm:$0xff]
    %v1199 = vld [vmem:[#allocation7 + $0xe8] sm:$0xff]
    %v1200 = vld [vmem:[#allocation7 + $0xf0] sm:$0xff]
    %v1201 = vld [vmem:[#allocation7 + $0xf8] sm:$0xff]
    %v1202 = vld [vmem:[#allocation7 + $0x100] sm:$0xff]
    %v1203 = vld [vmem:[#allocation7 + $0x108] sm:$0xff]
    %v1204 = vld [vmem:[#allocation7 + $0x110] sm:$0xff]
    %v1205 = vld [vmem:[#allocation7 + $0x118] sm:$0xff]
    %v1206 = vld [vmem:[#allocation7 + $0x120] sm:$0xff]
    %v1207 = vld [vmem:[#allocation7 + $0x128] sm:$0xff]
    %v1208 = vld [vmem:[#allocation7 + $0x130] sm:$0xff]
    %v1209 = vld [vmem:[#allocation7 + $0x138] sm:$0xff]
    %v1210 = vld [vmem:[#allocation7 + $0x140] sm:$0xff]
    %v1211 = vld [vmem:[#allocation7 + $0x148] sm:$0xff]
    %v1212 = vld [vmem:[#allocation7 + $0x150] sm:$0xff]
    %v1213 = vld [vmem:[#allocation7 + $0x158] sm:$0xff]
    %v1214 = vld [vmem:[#allocation7 + $0x160] sm:$0xff]
    %v1215 = vld [vmem:[#allocation7 + $0x168] sm:$0xff]
    %v1216 = vld [vmem:[#allocation7 + $0x170] sm:$0xff]
    %v1217 = vld [vmem:[#allocation7 + $0x178] sm:$0xff]
    %v1218 = vld [vmem:[#allocation7 + $0x180] sm:$0xff]
    %v1219 = vld [vmem:[#allocation7 + $0x188] sm:$0xff]
    %v1220 = vld [vmem:[#allocation7 + $0x190] sm:$0xff]
    %v1221 = vld [vmem:[#allocation7 + $0x198] sm:$0xff]
    %v1222 = vld [vmem:[#allocation7 + $0x1a0] sm:$0xff]
    %v1223 = vld [vmem:[#allocation7 + $0x1a8] sm:$0xff]
    %v1224 = vld [vmem:[#allocation7 + $0x1b0] sm:$0xff]
    %v1225 = vld [vmem:[#allocation7 + $0x1b8] sm:$0xff]
    %v1226 = vld [vmem:[#allocation7 + $0x1c0] sm:$0xff]
    %v1227 = vld [vmem:[#allocation7 + $0x1c8] sm:$0xff]
    %v1228 = vld [vmem:[#allocation7 + $0x1d0] sm:$0xff]
    %v1229 = vld [vmem:[#allocation7 + $0x1d8] sm:$0xff]
    %v1230 = vld [vmem:[#allocation7 + $0x1e0] sm:$0xff]
    %v1231 = vld [vmem:[#allocation7 + $0x1e8] sm:$0xff]
    %v1232 = vld [vmem:[#allocation7 + $0x1f0] sm:$0xff]
    %v1233 = vld [vmem:[#allocation7 + $0x1f8] sm:$0xff]
    %v1234 = vld [vmem:[#allocation9] sm:$0xff]
    %v1236 = vlaneseq
    %v1237 = vshrl.u32 %v1236, 7
    %v1238 = vsub.s32 0, %v1237
    %v1239 = vrot.slane %v1234, %v1238
    %v1240 = vlaneseq
    %v1241 = vshrl.u32 %v1240, 7
    %v1242 = vsub.s32 1, %v1241
    %v1243 = vrot.slane %v1234, %v1242
    %v1244 = vlaneseq
    %v1245 = vshrl.u32 %v1244, 7
    %v1246 = vsub.s32 2, %v1245
    %v1247 = vrot.slane %v1234, %v1246
    %v1248 = vlaneseq
    %v1249 = vshrl.u32 %v1248, 7
    %v1250 = vsub.s32 3, %v1249
    %v1251 = vrot.slane %v1234, %v1250
    %v1252 = vlaneseq
    %v1253 = vshrl.u32 %v1252, 7
    %v1254 = vsub.s32 4, %v1253
    %v1255 = vrot.slane %v1234, %v1254
    %v1256 = vlaneseq
    %v1257 = vshrl.u32 %v1256, 7
    %v1258 = vsub.s32 5, %v1257
    %v1259 = vrot.slane %v1234, %v1258
    %v1260 = vlaneseq
    %v1261 = vshrl.u32 %v1260, 7
    %v1262 = vsub.s32 6, %v1261
    %v1263 = vrot.slane %v1234, %v1262
    %v1264 = vlaneseq
    %v1265 = vshrl.u32 %v1264, 7
    %v1266 = vsub.s32 7, %v1265
    %v1267 = vrot.slane %v1234, %v1266
    %v1340 = vunpack.c.l.b16 %v1170
    %v1341 = vunpack.c.h.b16 %v1170
    %v1342 = vunpack.c.l.b16 %v1171
    %v1343 = vunpack.c.h.b16 %v1171
    %v1344 = vunpack.c.l.b16 %v1172
    %v1345 = vunpack.c.h.b16 %v1172
    %v1346 = vunpack.c.l.b16 %v1173
    %v1347 = vunpack.c.h.b16 %v1173
    %v1348 = vunpack.c.l.b16 %v1174
    %v1349 = vunpack.c.h.b16 %v1174
    %v1350 = vunpack.c.l.b16 %v1175
    %v1351 = vunpack.c.h.b16 %v1175
    %v1352 = vunpack.c.l.b16 %v1176
    %v1353 = vunpack.c.h.b16 %v1176
    %v1354 = vunpack.c.l.b16 %v1177
    %v1355 = vunpack.c.h.b16 %v1177
    %v1356 = vunpack.c.l.b16 %v1178
    %v1357 = vunpack.c.h.b16 %v1178
    %v1358 = vunpack.c.l.b16 %v1179
    %v1359 = vunpack.c.h.b16 %v1179
    %v1360 = vunpack.c.l.b16 %v1180
    %v1361 = vunpack.c.h.b16 %v1180
    %v1362 = vunpack.c.l.b16 %v1181
    %v1363 = vunpack.c.h.b16 %v1181
    %v1364 = vunpack.c.l.b16 %v1182
    %v1365 = vunpack.c.h.b16 %v1182
    %v1366 = vunpack.c.l.b16 %v1183
    %v1367 = vunpack.c.h.b16 %v1183
    %v1368 = vunpack.c.l.b16 %v1184
    %v1369 = vunpack.c.h.b16 %v1184
    %v1370 = vunpack.c.l.b16 %v1185
    %v1371 = vunpack.c.h.b16 %v1185
    %v1372 = vunpack.c.l.b16 %v1186
    %v1373 = vunpack.c.h.b16 %v1186
    %v1374 = vunpack.c.l.b16 %v1187
    %v1375 = vunpack.c.h.b16 %v1187
    %v1376 = vunpack.c.l.b16 %v1188
    %v1377 = vunpack.c.h.b16 %v1188
    %v1378 = vunpack.c.l.b16 %v1189
    %v1379 = vunpack.c.h.b16 %v1189
    %v1380 = vunpack.c.l.b16 %v1190
    %v1381 = vunpack.c.h.b16 %v1190
    %v1382 = vunpack.c.l.b16 %v1191
    %v1383 = vunpack.c.h.b16 %v1191
    %v1384 = vunpack.c.l.b16 %v1192
    %v1385 = vunpack.c.h.b16 %v1192
    %v1386 = vunpack.c.l.b16 %v1193
    %v1387 = vunpack.c.h.b16 %v1193
    %v1388 = vunpack.c.l.b16 %v1194
    %v1389 = vunpack.c.h.b16 %v1194
    %v1390 = vunpack.c.l.b16 %v1195
    %v1391 = vunpack.c.h.b16 %v1195
    %v1392 = vunpack.c.l.b16 %v1196
    %v1393 = vunpack.c.h.b16 %v1196
    %v1394 = vunpack.c.l.b16 %v1197
    %v1395 = vunpack.c.h.b16 %v1197
    %v1396 = vunpack.c.l.b16 %v1198
    %v1397 = vunpack.c.h.b16 %v1198
    %v1398 = vunpack.c.l.b16 %v1199
    %v1399 = vunpack.c.h.b16 %v1199
    %v1400 = vunpack.c.l.b16 %v1200
    %v1401 = vunpack.c.h.b16 %v1200
    %v1402 = vunpack.c.l.b16 %v1201
    %v1403 = vunpack.c.h.b16 %v1201
    %v1404 = vunpack.c.l.b16 %v1202
    %v1405 = vunpack.c.h.b16 %v1202
    %v1406 = vunpack.c.l.b16 %v1203
    %v1407 = vunpack.c.h.b16 %v1203
    %v1408 = vunpack.c.l.b16 %v1204
    %v1409 = vunpack.c.h.b16 %v1204
    %v1410 = vunpack.c.l.b16 %v1205
    %v1411 = vunpack.c.h.b16 %v1205
    %v1412 = vunpack.c.l.b16 %v1206
    %v1413 = vunpack.c.h.b16 %v1206
    %v1414 = vunpack.c.l.b16 %v1207
    %v1415 = vunpack.c.h.b16 %v1207
    %v1416 = vunpack.c.l.b16 %v1208
    %v1417 = vunpack.c.h.b16 %v1208
    %v1418 = vunpack.c.l.b16 %v1209
    %v1419 = vunpack.c.h.b16 %v1209
    %v1420 = vunpack.c.l.b16 %v1210
    %v1421 = vunpack.c.h.b16 %v1210
    %v1422 = vunpack.c.l.b16 %v1211
    %v1423 = vunpack.c.h.b16 %v1211
    %v1424 = vunpack.c.l.b16 %v1212
    %v1425 = vunpack.c.h.b16 %v1212
    %v1426 = vunpack.c.l.b16 %v1213
    %v1427 = vunpack.c.h.b16 %v1213
    %v1428 = vunpack.c.l.b16 %v1214
    %v1429 = vunpack.c.h.b16 %v1214
    %v1430 = vunpack.c.l.b16 %v1215
    %v1431 = vunpack.c.h.b16 %v1215
    %v1432 = vunpack.c.l.b16 %v1216
    %v1433 = vunpack.c.h.b16 %v1216
    %v1434 = vunpack.c.l.b16 %v1217
    %v1435 = vunpack.c.h.b16 %v1217
    %v1436 = vunpack.c.l.b16 %v1218
    %v1437 = vunpack.c.h.b16 %v1218
    %v1438 = vunpack.c.l.b16 %v1219
    %v1439 = vunpack.c.h.b16 %v1219
    %v1440 = vunpack.c.l.b16 %v1220
    %v1441 = vunpack.c.h.b16 %v1220
    %v1442 = vunpack.c.l.b16 %v1221
    %v1443 = vunpack.c.h.b16 %v1221
    %v1444 = vunpack.c.l.b16 %v1222
    %v1445 = vunpack.c.h.b16 %v1222
    %v1446 = vunpack.c.l.b16 %v1223
    %v1447 = vunpack.c.h.b16 %v1223
    %v1448 = vunpack.c.l.b16 %v1224
    %v1449 = vunpack.c.h.b16 %v1224
    %v1450 = vunpack.c.l.b16 %v1225
    %v1451 = vunpack.c.h.b16 %v1225
    %v1452 = vunpack.c.l.b16 %v1226
    %v1453 = vunpack.c.h.b16 %v1226
    %v1454 = vunpack.c.l.b16 %v1227
    %v1455 = vunpack.c.h.b16 %v1227
    %v1456 = vunpack.c.l.b16 %v1228
    %v1457 = vunpack.c.h.b16 %v1228
    %v1458 = vunpack.c.l.b16 %v1229
    %v1459 = vunpack.c.h.b16 %v1229
    %v1460 = vunpack.c.l.b16 %v1230
    %v1461 = vunpack.c.h.b16 %v1230
    %v1462 = vunpack.c.l.b16 %v1231
    %v1463 = vunpack.c.h.b16 %v1231
    %v1464 = vunpack.c.l.b16 %v1232
    %v1465 = vunpack.c.h.b16 %v1232
    %v1466 = vunpack.c.l.b16 %v1233
    %v1467 = vunpack.c.h.b16 %v1233
    %v1468 = vpack.c.b16 %v1348, %v1340
    %v1469 = vpack.c.b16 %v1349, %v1341
    %v1470 = vpack.c.b16 %v1350, %v1342
    %v1471 = vpack.c.b16 %v1351, %v1343
    %v1472 = vpack.c.b16 %v1352, %v1344
    %v1473 = vpack.c.b16 %v1353, %v1345
    %v1474 = vpack.c.b16 %v1354, %v1346
    %v1475 = vpack.c.b16 %v1355, %v1347
    %v1476 = vpack.c.b16 %v1364, %v1356
    %v1477 = vpack.c.b16 %v1365, %v1357
    %v1478 = vpack.c.b16 %v1366, %v1358
    %v1479 = vpack.c.b16 %v1367, %v1359
    %v1480 = vpack.c.b16 %v1368, %v1360
    %v1481 = vpack.c.b16 %v1369, %v1361
    %v1482 = vpack.c.b16 %v1370, %v1362
    %v1483 = vpack.c.b16 %v1371, %v1363
    %v1484 = vpack.c.b16 %v1380, %v1372
    %v1485 = vpack.c.b16 %v1381, %v1373
    %v1486 = vpack.c.b16 %v1382, %v1374
    %v1487 = vpack.c.b16 %v1383, %v1375
    %v1488 = vpack.c.b16 %v1384, %v1376
    %v1489 = vpack.c.b16 %v1385, %v1377
    %v1490 = vpack.c.b16 %v1386, %v1378
    %v1491 = vpack.c.b16 %v1387, %v1379
    %v1492 = vpack.c.b16 %v1396, %v1388
    %v1493 = vpack.c.b16 %v1397, %v1389
    %v1494 = vpack.c.b16 %v1398, %v1390
    %v1495 = vpack.c.b16 %v1399, %v1391
    %v1496 = vpack.c.b16 %v1400, %v1392
    %v1497 = vpack.c.b16 %v1401, %v1393
    %v1498 = vpack.c.b16 %v1402, %v1394
    %v1499 = vpack.c.b16 %v1403, %v1395
    %v1500 = vpack.c.b16 %v1412, %v1404
    %v1501 = vpack.c.b16 %v1413, %v1405
    %v1502 = vpack.c.b16 %v1414, %v1406
    %v1503 = vpack.c.b16 %v1415, %v1407
    %v1504 = vpack.c.b16 %v1416, %v1408
    %v1505 = vpack.c.b16 %v1417, %v1409
    %v1506 = vpack.c.b16 %v1418, %v1410
    %v1507 = vpack.c.b16 %v1419, %v1411
    %v1508 = vpack.c.b16 %v1428, %v1420
    %v1509 = vpack.c.b16 %v1429, %v1421
    %v1510 = vpack.c.b16 %v1430, %v1422
    %v1511 = vpack.c.b16 %v1431, %v1423
    %v1512 = vpack.c.b16 %v1432, %v1424
    %v1513 = vpack.c.b16 %v1433, %v1425
    %v1514 = vpack.c.b16 %v1434, %v1426
    %v1515 = vpack.c.b16 %v1435, %v1427
    %v1516 = vpack.c.b16 %v1444, %v1436
    %v1517 = vpack.c.b16 %v1445, %v1437
    %v1518 = vpack.c.b16 %v1446, %v1438
    %v1519 = vpack.c.b16 %v1447, %v1439
    %v1520 = vpack.c.b16 %v1448, %v1440
    %v1521 = vpack.c.b16 %v1449, %v1441
    %v1522 = vpack.c.b16 %v1450, %v1442
    %v1523 = vpack.c.b16 %v1451, %v1443
    %v1524 = vpack.c.b16 %v1460, %v1452
    %v1525 = vpack.c.b16 %v1461, %v1453
    %v1526 = vpack.c.b16 %v1462, %v1454
    %v1527 = vpack.c.b16 %v1463, %v1455
    %v1528 = vpack.c.b16 %v1464, %v1456
    %v1529 = vpack.c.b16 %v1465, %v1457
    %v1530 = vpack.c.b16 %v1466, %v1458
    %v1531 = vpack.c.b16 %v1467, %v1459
    %1596 = vmatprep.subr.bf16.mxu0 %v1469
    %1597 = vmatpush1.bf16.msra.mxu0 %v1468
    %1598 = vmatprep.subr.bf16.mxu0 %v1477
    %1599 = vmatpush1.bf16.msra.mxu0 %v1476
    %1600 = vmatprep.subr.bf16.mxu0 %v1485
    %1601 = vmatpush1.bf16.msra.mxu0 %v1484
    %1602 = vmatprep.subr.bf16.mxu0 %v1493
    %1603 = vmatpush1.bf16.msra.mxu0 %v1492
    %1604 = vmatprep.subr.bf16.mxu0 %v1501
    %1605 = vmatpush1.bf16.msra.mxu0 %v1500
    %1606 = vmatprep.subr.bf16.mxu0 %v1509
    %1607 = vmatpush1.bf16.msra.mxu0 %v1508
    %1608 = vmatprep.subr.bf16.mxu0 %v1517
    %1609 = vmatpush1.bf16.msra.mxu0 %v1516
    %1610 = vmatprep.subr.bf16.mxu0 %v1525
    %1611 = vmatpush1.bf16.msra.mxu0 %v1524
    %1612 = vmatprep.subr.bf16.mxu0 0
    %1613 = vmatpush1.bf16.msra.mxu0 0
    %1614 = vmatprep.subr.bf16.mxu0 0
    %1615 = vmatpush1.bf16.msra.mxu0 0
    %1616 = vmatprep.subr.bf16.mxu0 0
    %1617 = vmatpush1.bf16.msra.mxu0 0
    %1618 = vmatprep.subr.bf16.mxu0 0
    %1619 = vmatpush1.bf16.msra.mxu0 0
    %1620 = vmatprep.subr.bf16.mxu0 0
    %1621 = vmatpush1.bf16.msra.mxu0 0
    %1622 = vmatprep.subr.bf16.mxu0 0
    %1623 = vmatpush1.bf16.msra.mxu0 0
    %1624 = vmatprep.subr.bf16.mxu0 0
    %1625 = vmatpush1.bf16.msra.mxu0 0
    %1626 = vmatprep.subr.bf16.mxu0 0
    %1627 = vmatpush1.bf16.msra.mxu0 0
    %1628 = vmatprep.mubr.bf16.mxu0 0
    %1629 = vmatmul.mubr.bf16.gmra.mrb[0].mxu0 %v1169
    %v1630 = vpop.f32.mrb[0].mxu0
    %v1631 = vadd.f32 %v1239, %v1630
    %v1632 = vpop.f32.mrb[0].mxu0
    %v1633 = vadd.f32 %v1243, %v1632
    %v1634 = vpop.f32.mrb[0].mxu0
    %v1635 = vpop.f32.mrb[0].mxu0
    %1636 = vdwg.mxu0
    %1637 = vmatprep.subr.bf16.mxu0 %v1471
    %1638 = vmatpush1.bf16.msra.mxu0 %v1470
    %1639 = vmatprep.subr.bf16.mxu0 %v1479
    %1640 = vmatpush1.bf16.msra.mxu0 %v1478
    %1641 = vmatprep.subr.bf16.mxu0 %v1487
    %1642 = vmatpush1.bf16.msra.mxu0 %v1486
    %1643 = vmatprep.subr.bf16.mxu0 %v1495
    %1644 = vmatpush1.bf16.msra.mxu0 %v1494
    %1645 = vmatprep.subr.bf16.mxu0 %v1503
    %1646 = vmatpush1.bf16.msra.mxu0 %v1502
    %1647 = vmatprep.subr.bf16.mxu0 %v1511
    %1648 = vmatpush1.bf16.msra.mxu0 %v1510
    %1649 = vmatprep.subr.bf16.mxu0 %v1519
    %1650 = vmatpush1.bf16.msra.mxu0 %v1518
    %1651 = vmatprep.subr.bf16.mxu0 %v1527
    %1652 = vmatpush1.bf16.msra.mxu0 %v1526
    %1653 = vmatprep.subr.bf16.mxu0 0
    %1654 = vmatpush1.bf16.msra.mxu0 0
    %1655 = vmatprep.subr.bf16.mxu0 0
    %1656 = vmatpush1.bf16.msra.mxu0 0
    %1657 = vmatprep.subr.bf16.mxu0 0
    %1658 = vmatpush1.bf16.msra.mxu0 0
    %1659 = vmatprep.subr.bf16.mxu0 0
    %1660 = vmatpush1.bf16.msra.mxu0 0
    %1661 = vmatprep.subr.bf16.mxu0 0
    %1662 = vmatpush1.bf16.msra.mxu0 0
    %1663 = vmatprep.subr.bf16.mxu0 0
    %1664 = vmatpush1.bf16.msra.mxu0 0
    %1665 = vmatprep.subr.bf16.mxu0 0
    %1666 = vmatpush1.bf16.msra.mxu0 0
    %1667 = vmatprep.subr.bf16.mxu0 0
    %1668 = vmatpush1.bf16.msra.mxu0 0
    %1669 = vmatprep.mubr.bf16.mxu0 0
    %1670 = vmatmul.mubr.bf16.gmra.mrb[0].mxu0 %v1169
    %v1671 = vpop.f32.mrb[0].mxu0
    %v1672 = vadd.f32 %v1247, %v1671
    %v1673 = vpop.f32.mrb[0].mxu0
    %v1674 = vadd.f32 %v1251, %v1673
    %v1675 = vpop.f32.mrb[0].mxu0
    %v1676 = vpop.f32.mrb[0].mxu0
    %1677 = vdwg.mxu0
    %1678 = vmatprep.subr.bf16.mxu0 %v1473
    %1679 = vmatpush1.bf16.msra.mxu0 %v1472
    %1680 = vmatprep.subr.bf16.mxu0 %v1481
    %1681 = vmatpush1.bf16.msra.mxu0 %v1480
    %1682 = vmatprep.subr.bf16.mxu0 %v1489
    %1683 = vmatpush1.bf16.msra.mxu0 %v1488
    %1684 = vmatprep.subr.bf16.mxu0 %v1497
    %1685 = vmatpush1.bf16.msra.mxu0 %v1496
    %1686 = vmatprep.subr.bf16.mxu0 %v1505
    %1687 = vmatpush1.bf16.msra.mxu0 %v1504
    %1688 = vmatprep.subr.bf16.mxu0 %v1513
    %1689 = vmatpush1.bf16.msra.mxu0 %v1512
    %1690 = vmatprep.subr.bf16.mxu0 %v1521
    %1691 = vmatpush1.bf16.msra.mxu0 %v1520
    %1692 = vmatprep.subr.bf16.mxu0 %v1529
    %1693 = vmatpush1.bf16.msra.mxu0 %v1528
    %1694 = vmatprep.subr.bf16.mxu0 0
    %1695 = vmatpush1.bf16.msra.mxu0 0
    %1696 = vmatprep.subr.bf16.mxu0 0
    %1697 = vmatpush1.bf16.msra.mxu0 0
    %1698 = vmatprep.subr.bf16.mxu0 0
    %1699 = vmatpush1.bf16.msra.mxu0 0
    %1700 = vmatprep.subr.bf16.mxu0 0
    %1701 = vmatpush1.bf16.msra.mxu0 0
    %1702 = vmatprep.subr.bf16.mxu0 0
    %1703 = vmatpush1.bf16.msra.mxu0 0
    %1704 = vmatprep.subr.bf16.mxu0 0
    %1705 = vmatpush1.bf16.msra.mxu0 0
    %1706 = vmatprep.subr.bf16.mxu0 0
    %1707 = vmatpush1.bf16.msra.mxu0 0
    %1708 = vmatprep.subr.bf16.mxu0 0
    %1709 = vmatpush1.bf16.msra.mxu0 0
    %1710 = vmatprep.mubr.bf16.mxu0 0
    %1711 = vmatmul.mubr.bf16.gmra.mrb[0].mxu0 %v1169
    %v1712 = vpop.f32.mrb[0].mxu0
    %v1713 = vadd.f32 %v1255, %v1712
    %v1714 = vpop.f32.mrb[0].mxu0
    %v1715 = vadd.f32 %v1259, %v1714
    %v1716 = vpop.f32.mrb[0].mxu0
    %v1717 = vpop.f32.mrb[0].mxu0
    %1718 = vdwg.mxu0
    %1719 = vmatprep.subr.bf16.mxu0 %v1475
    %1720 = vmatpush1.bf16.msra.mxu0 %v1474
    %1721 = vmatprep.subr.bf16.mxu0 %v1483
    %1722 = vmatpush1.bf16.msra.mxu0 %v1482
    %1723 = vmatprep.subr.bf16.mxu0 %v1491
    %1724 = vmatpush1.bf16.msra.mxu0 %v1490
    %1725 = vmatprep.subr.bf16.mxu0 %v1499
    %1726 = vmatpush1.bf16.msra.mxu0 %v1498
    %1727 = vmatprep.subr.bf16.mxu0 %v1507
    %1728 = vmatpush1.bf16.msra.mxu0 %v1506
    %1729 = vmatprep.subr.bf16.mxu0 %v1515
    %1730 = vmatpush1.bf16.msra.mxu0 %v1514
    %1731 = vmatprep.subr.bf16.mxu0 %v1523
    %1732 = vmatpush1.bf16.msra.mxu0 %v1522
    %1733 = vmatprep.subr.bf16.mxu0 %v1531
    %1734 = vmatpush1.bf16.msra.mxu0 %v1530
    %1735 = vmatprep.subr.bf16.mxu0 0
    %1736 = vmatpush1.bf16.msra.mxu0 0
    %1737 = vmatprep.subr.bf16.mxu0 0
    %1738 = vmatpush1.bf16.msra.mxu0 0
    %1739 = vmatprep.subr.bf16.mxu0 0
    %1740 = vmatpush1.bf16.msra.mxu0 0
    %1741 = vmatprep.subr.bf16.mxu0 0
    %1742 = vmatpush1.bf16.msra.mxu0 0
    %1743 = vmatprep.subr.bf16.mxu0 0
    %1744 = vmatpush1.bf16.msra.mxu0 0
    %1745 = vmatprep.subr.bf16.mxu0 0
    %1746 = vmatpush1.bf16.msra.mxu0 0
    %1747 = vmatprep.subr.bf16.mxu0 0
    %1748 = vmatpush1.bf16.msra.mxu0 0
    %1749 = vmatprep.subr.bf16.mxu0 0
    %1750 = vmatpush1.bf16.msra.mxu0 0
    %1751 = vmatprep.mubr.bf16.mxu0 0
    %1752 = vmatmul.mubr.bf16.gmra.mrb[0].mxu0 %v1169
    %v1753 = vpop.f32.mrb[0].mxu0
    %v1754 = vadd.f32 %v1263, %v1753
    %v1755 = vpop.f32.mrb[0].mxu0
    %v1756 = vadd.f32 %v1267, %v1755
    %v1757 = vpop.f32.mrb[0].mxu0
    %v1758 = vpop.f32.mrb[0].mxu0
    %1759 = vdwg.mxu0
    %v1760 = vxor.u32 %v1631, 2147483648
    %v1761 = vxor.u32 %v1633, 2147483648
    %v1762 = vxor.u32 %v1672, 2147483648
    %v1763 = vxor.u32 %v1674, 2147483648
    %v1764 = vxor.u32 %v1713, 2147483648
    %v1765 = vxor.u32 %v1715, 2147483648
    %v1766 = vxor.u32 %v1754, 2147483648
    %v1767 = vxor.u32 %v1756, 2147483648
    %v1768 = vmul.f32 %v1760, 1.442695
    %v1769 = vpow.pop %v1768
    %v1770 = vmul.f32 %v1761, 1.442695
    %v1771 = vpow.pop %v1770
    %v1772 = vmul.f32 %v1762, 1.442695
    %v1773 = vpow.pop %v1772
    %v1774 = vmul.f32 %v1763, 1.442695
    %v1775 = vpow.pop %v1774
    %v1776 = vmul.f32 %v1764, 1.442695
    %v1777 = vpow.pop %v1776
    %v1778 = vmul.f32 %v1765, 1.442695
    %v1779 = vpow.pop %v1778
    %v1780 = vmul.f32 %v1766, 1.442695
    %v1781 = vpow.pop %v1780
    %v1782 = vmul.f32 %v1767, 1.442695
    %v1783 = vpow.pop %v1782
    %v1784 = vadd.f32 %v1769, 1.0
    %v1785 = vadd.f32 %v1771, 1.0
    %v1786 = vadd.f32 %v1773, 1.0
    %v1787 = vadd.f32 %v1775, 1.0
    %v1788 = vadd.f32 %v1777, 1.0
    %v1789 = vadd.f32 %v1779, 1.0
    %v1790 = vadd.f32 %v1781, 1.0
    %v1791 = vadd.f32 %v1783, 1.0
    %v1792 = vrcp.pop %v1784
    %v1793 = vmul.f32 1.0, %v1792
    %v1794 = vrcp.pop %v1785
    %v1795 = vmul.f32 1.0, %v1794
    %v1796 = vrcp.pop %v1786
    %v1797 = vmul.f32 1.0, %v1796
    %v1798 = vrcp.pop %v1787
    %v1799 = vmul.f32 1.0, %v1798
    %v1800 = vrcp.pop %v1788
    %v1801 = vmul.f32 1.0, %v1800
    %v1802 = vrcp.pop %v1789
    %v1803 = vmul.f32 1.0, %v1802
    %v1804 = vrcp.pop %v1790
    %v1805 = vmul.f32 1.0, %v1804
    %v1806 = vrcp.pop %v1791
    %v1807 = vmul.f32 1.0, %v1806
    %1808 = vst [vmem:[%s14] sm:$0xff] %v1793
    %1809 = vst [vmem:[%s14 + $0x8] sm:$0xff] %v1795
    %1810 = vst [vmem:[%s14 + $0x10] sm:$0xff] %v1797
    %1811 = vst [vmem:[%s14 + $0x18] sm:$0xff] %v1799
    %1812 = vst [vmem:[%s14 + $0x20] sm:$0xff] %v1801
    %1813 = vst [vmem:[%s14 + $0x28] sm:$0xff] %v1803
    %1814 = vst [vmem:[%s14 + $0x30] sm:$0xff] %v1805
    %1815 = vst [vmem:[%s14 + $0x38] sm:$0xff] %v1807
    %v1816 = vld [vmem:[%s12] sm:$0xff]
    %v1817 = vld [vmem:[%s12 + $0x8] sm:$0xff]
    %v1818 = vld [vmem:[%s12 + $0x10] sm:$0xff]
    %v1819 = vld [vmem:[%s12 + $0x18] sm:$0xff]
    %v1820 = vld [vmem:[%s12 + $0x20] sm:$0xff]
    %v1821 = vld [vmem:[%s12 + $0x28] sm:$0xff]
    %v1822 = vld [vmem:[%s12 + $0x30] sm:$0xff]
    %v1823 = vld [vmem:[%s12 + $0x38] sm:$0xff]
    %v1824 = vld [vmem:[%s12 + $0x40] sm:$0xff]
    %v1825 = vld [vmem:[%s12 + $0x48] sm:$0xff]
    %v1826 = vld [vmem:[%s12 + $0x50] sm:$0xff]
    %v1827 = vld [vmem:[%s12 + $0x58] sm:$0xff]
    %v1828 = vld [vmem:[%s12 + $0x60] sm:$0xff]
    %v1829 = vld [vmem:[%s12 + $0x68] sm:$0xff]
    %v1830 = vld [vmem:[%s12 + $0x70] sm:$0xff]
    %v1831 = vld [vmem:[%s12 + $0x78] sm:$0xff]
    %1832 = vmatprep.subr.mxu0 0.0
    %1833 = vmatpush1.xpose.msra.mxu0 %v1816
    %1834 = vmatprep.subr.mxu0 0.0
    %1835 = vmatpush1.xpose.msra.mxu0 %v1817
    %1836 = vmatprep.subr.mxu0 0.0
    %1837 = vmatpush1.xpose.msra.mxu0 %v1818
    %1838 = vmatprep.subr.mxu0 0.0
    %1839 = vmatpush1.xpose.msra.mxu0 %v1819
    %1840 = vmatprep.subr.mxu0 0.0
    %1841 = vmatpush1.xpose.msra.mxu0 %v1820
    %1842 = vmatprep.subr.mxu0 0.0
    %1843 = vmatpush1.xpose.msra.mxu0 %v1821
    %1844 = vmatprep.subr.mxu0 0.0
    %1845 = vmatpush1.xpose.msra.mxu0 %v1822
    %1846 = vmatprep.subr.mxu0 0.0
    %1847 = vmatpush1.xpose.msra.mxu0 %v1823
    %1848 = vmatprep.subr.mxu0 0.0
    %1849 = vmatpush1.xpose.msra.mxu0 %v1824
    %1850 = vmatprep.subr.mxu0 0.0
    %1851 = vmatpush1.xpose.msra.mxu0 %v1825
    %1852 = vmatprep.subr.mxu0 0.0
    %1853 = vmatpush1.xpose.msra.mxu0 %v1826
    %1854 = vmatprep.subr.mxu0 0.0
    %1855 = vmatpush1.xpose.msra.mxu0 %v1827
    %1856 = vmatprep.subr.mxu0 0.0
    %1857 = vmatpush1.xpose.msra.mxu0 %v1828
    %1858 = vmatprep.subr.mxu0 0.0
    %1859 = vmatpush1.xpose.msra.mxu0 %v1829
    %1860 = vmatprep.subr.mxu0 0.0
    %1861 = vmatpush1.xpose.msra.mxu0 %v1830
    %1862 = vmatprep.subr.mxu0 0.0
    %1863 = vmatpush1.xpose.msra.mxu0 %v1831
    %1864 = vmatprep.subr.mxu0 0.0
    %1865 = vmatpush1.xpose.msra.mxu0 0.0
    %1866 = vmatprep.subr.mxu0 0.0
    %1867 = vmatpush1.xpose.msra.mxu0 0.0
    %1868 = vmatprep.subr.mxu0 0.0
    %1869 = vmatpush1.xpose.msra.mxu0 0.0
    %1870 = vmatprep.subr.mxu0 0.0
    %1871 = vmatpush1.xpose.msra.mxu0 0.0
    %1872 = vmatprep.subr.mxu0 0.0
    %1873 = vmatpush1.xpose.msra.mxu0 0.0
    %1874 = vmatprep.subr.mxu0 0.0
    %1875 = vmatpush1.xpose.msra.mxu0 0.0
    %1876 = vmatprep.subr.mxu0 0.0
    %1877 = vmatpush1.xpose.msra.mxu0 0.0
    %1878 = vmatprep.subr.mxu0 0.0
    %1879 = vmatpush1.xpose.msra.mxu0 0.0
    %1880 = vmatprep.subr.mxu0 0.0
    %1881 = vmatpush1.xpose.msra.mxu0 0.0
    %1882 = vmatprep.subr.mxu0 0.0
    %1883 = vmatpush1.xpose.msra.mxu0 0.0
    %1884 = vmatprep.subr.mxu0 0.0
    %1885 = vmatpush1.xpose.msra.mxu0 0.0
    %1886 = vmatprep.subr.mxu0 0.0
    %1887 = vmatpush1.xpose.msra.mxu0 0.0
    %1888 = vmatprep.subr.mxu0 0.0
    %1889 = vmatpush1.xpose.msra.mxu0 0.0
    %1890 = vmatprep.subr.mxu0 0.0
    %1891 = vmatpush1.xpose.msra.mxu0 0.0
    %1892 = vmatprep.subr.mxu0 0.0
    %1893 = vmatpush1.xpose.msra.mxu0 0.0
    %1894 = vmatprep.subr.mxu0 0.0
    %1895 = vmatpush1.xpose.msra.mxu0 0.0
    %1896 = vmatprep.mubr.f32.mxu0 0.0
    %1897 = vmatmul.mubr.f32.gmra.mrb[0].mxu0 %v932
    %v1898 = vpop.f32.mrb[0].mxu0
    %v1899 = vadd.f32 0.0, %v1898
    %v1900 = vpop.f32.mrb[0].mxu0
    %1901 = vdwg.mxu0
    %v1902 = vmul.f32 %v1899, 2.0
    %v1903 = vld [vmem:[#allocation10] sm:$0x1]
    %v1905 = vlaneseq
    %v1906 = vshrl.u32 %v1905, 7
    %v1907 = vsub.s32 0, %v1906
    %v1908 = vrot.slane %v1903, %v1907
    %v1910 = vsub.f32 %v1902, %v1908
    %1911 = vmax.xlane.f32.xlu0 %v1910
    %v1912 = vpop.xlane.xlu0 %1911
    %v1913 = vsub.f32 %v1910, %v1912
    %v1914 = vmul.f32 %v1913, 1.442695
    %v1915 = vpow.pop %v1914
    %1916 = vadd.xlane.f32.xlu0 %v1915
    %v1917 = vpop.xlane.xlu0 %1916
    %v1918 = vrcp.pop %v1917
    %v1919 = vmul.f32 %v1915, %v1918
    %1920 = vst [vmem:[%s18] sm:$0xff] %v1919
    %1921 = vmatprep.subr.mxu0 0.0
    %1922 = vmatpush1.msra.mxu0 %v1816
    %1923 = vmatprep.subr.mxu0 0.0
    %1924 = vmatpush1.msra.mxu0 %v1817
    %1925 = vmatprep.subr.mxu0 0.0
    %1926 = vmatpush1.msra.mxu0 %v1818
    %1927 = vmatprep.subr.mxu0 0.0
    %1928 = vmatpush1.msra.mxu0 %v1819
    %1929 = vmatprep.subr.mxu0 0.0
    %1930 = vmatpush1.msra.mxu0 %v1820
    %1931 = vmatprep.subr.mxu0 0.0
    %1932 = vmatpush1.msra.mxu0 %v1821
    %1933 = vmatprep.subr.mxu0 0.0
    %1934 = vmatpush1.msra.mxu0 %v1822
    %1935 = vmatprep.subr.mxu0 0.0
    %1936 = vmatpush1.msra.mxu0 %v1823
    %1937 = vmatprep.subr.mxu0 0.0
    %1938 = vmatpush1.msra.mxu0 %v1824
    %1939 = vmatprep.subr.mxu0 0.0
    %1940 = vmatpush1.msra.mxu0 %v1825
    %1941 = vmatprep.subr.mxu0 0.0
    %1942 = vmatpush1.msra.mxu0 %v1826
    %1943 = vmatprep.subr.mxu0 0.0
    %1944 = vmatpush1.msra.mxu0 %v1827
    %1945 = vmatprep.subr.mxu0 0.0
    %1946 = vmatpush1.msra.mxu0 %v1828
    %1947 = vmatprep.subr.mxu0 0.0
    %1948 = vmatpush1.msra.mxu0 %v1829
    %1949 = vmatprep.subr.mxu0 0.0
    %1950 = vmatpush1.msra.mxu0 %v1830
    %1951 = vmatprep.subr.mxu0 0.0
    %1952 = vmatpush1.msra.mxu0 %v1831
    %1953 = vmatprep.subr.mxu0 0.0
    %1954 = vmatpush1.msra.mxu0 0.0
    %1955 = vmatprep.subr.mxu0 0.0
    %1956 = vmatpush1.msra.mxu0 0.0
    %1957 = vmatprep.subr.mxu0 0.0
    %1958 = vmatpush1.msra.mxu0 0.0
    %1959 = vmatprep.subr.mxu0 0.0
    %1960 = vmatpush1.msra.mxu0 0.0
    %1961 = vmatprep.subr.mxu0 0.0
    %1962 = vmatpush1.msra.mxu0 0.0
    %1963 = vmatprep.subr.mxu0 0.0
    %1964 = vmatpush1.msra.mxu0 0.0
    %1965 = vmatprep.subr.mxu0 0.0
    %1966 = vmatpush1.msra.mxu0 0.0
    %1967 = vmatprep.subr.mxu0 0.0
    %1968 = vmatpush1.msra.mxu0 0.0
    %1969 = vmatprep.subr.mxu0 0.0
    %1970 = vmatpush1.msra.mxu0 0.0
    %1971 = vmatprep.subr.mxu0 0.0
    %1972 = vmatpush1.msra.mxu0 0.0
    %1973 = vmatprep.subr.mxu0 0.0
    %1974 = vmatpush1.msra.mxu0 0.0
    %1975 = vmatprep.subr.mxu0 0.0
    %1976 = vmatpush1.msra.mxu0 0.0
    %1977 = vmatprep.subr.mxu0 0.0
    %1978 = vmatpush1.msra.mxu0 0.0
    %1979 = vmatprep.subr.mxu0 0.0
    %1980 = vmatpush1.msra.mxu0 0.0
    %1981 = vmatprep.subr.mxu0 0.0
    %1982 = vmatpush1.msra.mxu0 0.0
    %1983 = vmatprep.subr.mxu0 0.0
    %1984 = vmatpush1.msra.mxu0 0.0
    %1985 = vmatprep.mubr.f32.mxu0 0.0
    %1986 = vmatmul.mubr.f32.gmra.mrb[0].mxu0 %v1919
    %v1987 = vpop.f32.mrb[0].mxu0
    %v1988 = vadd.f32 0.0, %v1987
    %v1989 = vpop.f32.mrb[0].mxu0
    %1990 = vdwg.mxu0
    %1991 = vst [vmem:[%s17] sm:$0xff] %v1988
    // Predicated region
    $region82: #{softvq_vae_forward.1} parent=1 // pred_check
      _
    $region83: #{softvq_vae_forward.1} parent=1 // pred_check_branch
      %1993 = sbr.rel (0) target = $region85
    $region84: #{softvq_vae_forward.1} parent=1 // pred_region
      _
    $region85: #{softvq_vae_forward.1} parent=1 // pred_fallthru
      _
    // Predicated region
    $region86: #{softvq_vae_forward.1} parent=1 // pred_check
      _
    $region87: #{softvq_vae_forward.1} parent=1 // pred_check_branch
      %1995 = sbr.rel (0) target = $region89
    $region88: #{softvq_vae_forward.1} parent=1 // pred_region
      _
    $region89: #{softvq_vae_forward.1} parent=1 // pred_fallthru
      _
    // Predicated region
    $region90: #{softvq_vae_forward.1} parent=1 // pred_check
      _
    $region91: #{softvq_vae_forward.1} parent=1 // pred_check_branch
      %1997 = sbr.rel (0) target = $region93
    $region92: #{softvq_vae_forward.1} parent=1 // pred_region
      _
    $region93: #{softvq_vae_forward.1} parent=1 // pred_fallthru
      _
    // Predicated region
    $region94: #{softvq_vae_forward.1} parent=1 // pred_check
      _
    $region95: #{softvq_vae_forward.1} parent=1 // pred_check_branch
      %1999 = sbr.rel (0) target = $region97
    $region96: #{softvq_vae_forward.1} parent=1 // pred_region
      _
    $region97: #{softvq_vae_forward.1} parent=1 // pred_fallthru
      _
    // Predicated region
    $region98: #{softvq_vae_forward.1} parent=1 // pred_check
      _
    $region99: #{softvq_vae_forward.1} parent=1 // pred_check_branch
      %2001 = sbr.rel (0) target = $region101
    $region100: #{softvq_vae_forward.1} parent=1 // pred_region
      _
    $region101: #{softvq_vae_forward.1} parent=1 // pred_fallthru
      _
    // Predicated region
    $region102: #{softvq_vae_forward.1} parent=1 // pred_check
      _
    $region103: #{softvq_vae_forward.1} parent=1 // pred_check_branch
      %2003 = sbr.rel (0) target = $region105
    $region104: #{softvq_vae_forward.1} parent=1 // pred_region
      _
    $region105: #{softvq_vae_forward.1} parent=1 // pred_fallthru
      _
    // Predicated region
    $region106: #{softvq_vae_forward.1} parent=1 // pred_check
      _
    $region107: #{softvq_vae_forward.1} parent=1 // pred_check_branch
      %2005 = sbr.rel (0) target = $region109
    $region108: #{softvq_vae_forward.1} parent=1 // pred_region
      _
    $region109: #{softvq_vae_forward.1} parent=1 // pred_fallthru
      _
    // Predicated region
    $region110: #{softvq_vae_forward.1} parent=1 // pred_check
      _
    $region111: #{softvq_vae_forward.1} parent=1 // pred_check_branch
      %2007 = sbr.rel (0) target = $region113
    $region112: #{softvq_vae_forward.1} parent=1 // pred_region
      _
    $region113: #{softvq_vae_forward.1} parent=1 // pred_fallthru
      _
    // Predicated region
    $region114: #{softvq_vae_forward.1} parent=1 // pred_check
      _
    $region115: #{softvq_vae_forward.1} parent=1 // pred_check_branch
      %2009 = sbr.rel (0) target = $region117
    $region116: #{softvq_vae_forward.1} parent=1 // pred_region
      _
    $region117: #{softvq_vae_forward.1} parent=1 // pred_fallthru
      _
    // Predicated region
    $region118: #{softvq_vae_forward.1} parent=1 // pred_check
      _
    $region119: #{softvq_vae_forward.1} parent=1 // pred_check_branch
      %2011 = sbr.rel (0) target = $region121
    $region120: #{softvq_vae_forward.1} parent=1 // pred_region
      _
    $region121: #{softvq_vae_forward.1} parent=1 // pred_fallthru
      _
    %2012 = vsyncpa [#allocation3], 1
    %2013 = vsyncpa [#allocation5], 1
    %2014 = vsyncpa [#allocation8], 1
    %2015 = vsyncpa [#allocation11], 1

</llo_original>
